<compile_context>
chip_gen: v7x
topology: tpu7x:2x2x1
jax: 0.10.0
libtpu: 0.0.40
codegen_flags: <defaults>
</compile_context>

<pallas_src>
import math
from functools import partial

import jax
import jax.numpy as jnp
from jax import lax
from jax.experimental import pallas as pl
from jax.experimental.pallas import tpu as pltpu

_BN_EPS = 1e-3
_SUBLANE = 16          # bf16 sublane pack -> aligned row strides


def _round_up(x, m):
    return (x + m - 1) // m * m


def _lane(c):
    return _round_up(c, 128)


def _query_vmem_capacity():
    try:
        info = pltpu.get_tpu_info()
        cap = int(getattr(info, "vmem_capacity_bytes", 0)) or 64 * 2**20
    except Exception:
        cap = 64 * 2**20
    return cap


_VMEM_CAP = _query_vmem_capacity()
if _VMEM_CAP >= 100 * 2**20:           # v5e / v6e: 128 MiB physical VMEM
    _VMEM_LIMIT = 64 * 2**20
    _DIRECT_CONV_BUDGET = 28 * 2**20
else:                                  # v7x (64 MiB) or unknown
    _VMEM_LIMIT = 42 * 2**20
    _DIRECT_CONV_BUDGET = 20 * 2**20


# --------------------------------------------------------------------------
# GEMM tiling
# --------------------------------------------------------------------------
def _tile_m_or_n(dim):
    """Pick (tile, padded_dim) for an M or N GEMM dimension."""
    if dim <= 768:                     # single tile, 128-lane aligned
        t = _round_up(dim, 128)
        return t, t
    for t in (512, 256):               # prefer wide tiles (256-wide MXU on v6e/v7x)
        p = _round_up(dim, t)
        if p - dim <= max(dim // 8, 128):
            return t, p
    return 128, _round_up(dim, 128)


def _tile_k(k):
    """Pick (tile, padded_dim) for the K GEMM dimension (128-lane aligned)."""
    kp = _round_up(k, 128)
    if k <= 512:
        return kp, kp                  # single K block -> no accumulator pass
    for t in (512, 384, 256):
        if kp % t == 0:
            return t, kp
    return 128, kp


# --------------------------------------------------------------------------
# Pallas kernels
# --------------------------------------------------------------------------
def _gemm_bn_act_kernel(lhs_ref, rhs_ref, scale_ref, shift_ref, out_ref, acc_ref,
                        *, relu):
    """out = act(lhs @ rhs * scale + shift); bf16 operands, f32 accumulation."""
    @pl.when(pl.program_id(2) == 0)
    def _():
        acc_ref[...] = jnp.zeros_like(acc_ref)

    acc_ref[...] += jnp.dot(lhs_ref[...], rhs_ref[...],
                            preferred_element_type=jnp.float32)

    @pl.when(pl.program_id(2) == pl.num_programs(2) - 1)
    def _():
        y = acc_ref[...] * scale_ref[...] + shift_ref[...]
        if relu:
            y = jnp.maximum(y, 0.0)
        out_ref[...] = y.astype(out_ref.dtype)


def _gemm_bn_act_single_kernel(lhs_ref, rhs_ref, scale_ref, shift_ref, out_ref,
                               *, relu):
    """Single-K-block variant: no accumulator scratch, no K grid axis."""
    y = jnp.dot(lhs_ref[...], rhs_ref[...], preferred_element_type=jnp.float32)
    y = y * scale_ref[...] + shift_ref[...]
    if relu:
        y = jnp.maximum(y, 0.0)
    out_ref[...] = y.astype(out_ref.dtype)


def fused_matmul_bn_relu(lhs, rhs, scale, shift, relu=True):
    """relu(lhs @ rhs * scale + shift) with per-column scale/shift (bf16 out)."""
    M, K = lhs.shape
    K2, N = rhs.shape
    assert K == K2
    TM, Mp = _tile_m_or_n(M)
    TN, Np = _tile_m_or_n(N)
    TK, Kp = _tile_k(K)

    lhs = lhs.astype(jnp.bfloat16)
    rhs = rhs.astype(jnp.bfloat16)
    if (Mp, Kp) != (M, K):
        lhs = jnp.pad(lhs, ((0, Mp - M), (0, Kp - K)))
    if (Kp, Np) != (K, N):
        rhs = jnp.pad(rhs, ((0, Kp - K), (0, Np - N)))
    scale_p = jnp.pad(scale.astype(jnp.float32), (0, Np - N)).reshape(1, Np)
    shift_p = jnp.pad(shift.astype(jnp.float32), (0, Np - N)).reshape(1, Np)

    if Kp == TK:
        out = pl.pallas_call(
            partial(_gemm_bn_act_single_kernel, relu=relu),
            out_shape=jax.ShapeDtypeStruct((Mp, Np), jnp.bfloat16),
            grid_spec=pltpu.PrefetchScalarGridSpec(
                num_scalar_prefetch=0,
                grid=(Mp // TM, Np // TN),
                in_specs=[
                    pl.BlockSpec((TM, Kp), lambda i, j: (i, 0)),
                    pl.BlockSpec((Kp, TN), lambda i, j: (0, j)),
                    pl.BlockSpec((1, TN), lambda i, j: (0, j)),
                    pl.BlockSpec((1, TN), lambda i, j: (0, j)),
                ],
                out_specs=pl.BlockSpec((TM, TN), lambda i, j: (i, j)),
            ),
            compiler_params=pltpu.CompilerParams(
                dimension_semantics=("parallel", "parallel"),
                vmem_limit_bytes=_VMEM_LIMIT),
        )(lhs, rhs, scale_p, shift_p)
    else:
        out = pl.pallas_call(
            partial(_gemm_bn_act_kernel, relu=relu),
            out_shape=jax.ShapeDtypeStruct((Mp, Np), jnp.bfloat16),
            grid_spec=pltpu.PrefetchScalarGridSpec(
                num_scalar_prefetch=0,
                grid=(Mp // TM, Np // TN, Kp // TK),
                in_specs=[
                    pl.BlockSpec((TM, TK), lambda i, j, k: (i, k)),
                    pl.BlockSpec((TK, TN), lambda i, j, k: (k, j)),
                    pl.BlockSpec((1, TN), lambda i, j, k: (0, j)),
                    pl.BlockSpec((1, TN), lambda i, j, k: (0, j)),
                ],
                out_specs=pl.BlockSpec((TM, TN), lambda i, j, k: (i, j)),
                scratch_shapes=[pltpu.VMEM((TM, TN), jnp.float32)],
            ),
            compiler_params=pltpu.CompilerParams(
                dimension_semantics=("parallel", "parallel", "arbitrary"),
                vmem_limit_bytes=_VMEM_LIMIT),
        )(lhs, rhs, scale_p, shift_p)

    if (Mp, Np) != (M, N):
        out = out[:M, :N]
    return out


def _direct_conv_packed_kernel(x_ref, w_ref, scale_ref, shift_ref, out_ref,
                               lhs_ref, *, kh, kw, cin, wa, bh, relu):
    """Small-Cin stride-1 conv: pack kh*kw taps into K in VMEM, one big matmul.

    x_ref:   (1, (bh+kh)*wa, cin)   bf16  flattened padded band (halo rows incl.)
    w_ref:   (kh*kw*cin, cout)      bf16
    lhs_ref: (bh*wa, kh*kw*cin)     bf16 VMEM scratch (per-band im2col)
    out_ref: (1, bh*wa, cout)       bf16 (bleed columns sliced off outside)
    """
    m = bh * wa
    for dy in range(kh):
        for dx in range(kw):
            t = dy * kw + dx
            off = dy * wa + dx          # dy*wa is sublane-aligned (wa % 16 == 0)
            lhs_ref[:, t * cin:(t + 1) * cin] = x_ref[0, off:off + m, :]
    y = jnp.dot(lhs_ref[...], w_ref[...], preferred_element_type=jnp.float32)
    y = y * scale_ref[...] + shift_ref[...]
    if relu:
        y = jnp.maximum(y, 0.0)
    out_ref[0] = y.astype(out_ref.dtype)


def _direct_conv_acc_kernel(x_ref, w_ref, scale_ref, shift_ref, out_ref,
                            acc_ref, *, kh, kw, wa, bh, relu):
    """Large-Cin stride-1 conv: per-tap MXU matmuls accumulated in f32 VMEM.

    x_ref:   (1, (bh+kh)*wa, cin)  bf16
    w_ref:   (kh*kw, cin, cout)    bf16
    acc_ref: (bh*wa, cout)         f32 VMEM scratch
    """
    m = bh * wa
    for dy in range(kh):
        for dx in range(kw):
            t = dy * kw + dx
            off = dy * wa + dx
            contrib = jnp.dot(x_ref[0, off:off + m, :], w_ref[t],
                              preferred_element_type=jnp.float32)
            if t == 0:
                acc_ref[...] = contrib
            else:
                acc_ref[...] += contrib
    y = acc_ref[...] * scale_ref[...] + shift_ref[...]
    if relu:
        y = jnp.maximum(y, 0.0)
    out_ref[0] = y.astype(out_ref.dtype)


def _pick_bands(oh, wa, cin, cout, kh, kw, packed):
    """Pick (band_height, n_bands) so the per-band VMEM footprint fits budget."""
    lane_in, lane_out = _lane(cin), _lane(cout)
    k_packed = _lane(kh * kw * cin)

    def footprint(bh):
        band_rows = bh + kh
        f = 2 * band_rows * wa * lane_in * 2        # input block, double-buffered
        f += 2 * bh * wa * lane_out * 2             # output block, double-buffered
        if packed:
            f += bh * wa * k_packed * 2             # packed-LHS scratch (bf16)
        else:
            f += bh * wa * lane_out * 4             # f32 accumulator scratch
        f += 2 * bh * wa * lane_out * 4             # epilogue temporaries (f32)
        f += 2 * kh * kw * _round_up(cin, 8) * lane_out * 2
        return f

    for n_bands in range(1, oh + 1):
        bh = -(-oh // n_bands)
        if footprint(bh) <= _DIRECT_CONV_BUDGET:
            return bh, n_bands
    return None


def conv_direct(p, x, relu=True):
    """Row-band-tiled stride-1 BasicConv2d (no im2col HBM blow-up)."""
    w = p['w']
    kh, kw, cin, cout = w.shape
    ph, pw = p['padding']
    nb, H, W, _ = x.shape
    Hp, Wp = H + 2 * ph, W + 2 * pw
    OH, OW = Hp - kh + 1, Wp - kw + 1
    Wa = _round_up(Wp, _SUBLANE)           # aligned row stride inside the band
    packed = cin < 128                     # pack taps into K when MXU is underfed

    pick = _pick_bands(OH, Wa, cin, cout, kh, kw, packed)
    if pick is None:                       # shouldn't trigger for this network
        return conv_im2col(p, x, relu=relu)
    bh, n_bands = pick
    band_rows = bh + kh                    # +1 spare row for the kw-1 column halo
    Hneed = n_bands * bh + kh

    xp = jnp.pad(x.astype(jnp.bfloat16),
                 ((0, 0), (ph, Hneed - H - ph), (pw, Wa - W - pw), (0, 0)))
    if n_bands == 1:
        xb = xp[:, None, :band_rows]
    else:                                  # replicate kh halo rows per band
        idx = (jnp.arange(n_bands) * bh)[:, None] + jnp.arange(band_rows)[None, :]
        xb = jnp.take(xp, idx, axis=1)     # (nb, n_bands, band_rows, Wa, cin)
    xf = xb.reshape(nb * n_bands, band_rows * Wa, cin)

    scale = p['scale'].astype(jnp.float32).reshape(1, cout)
    shift = p['shift'].astype(jnp.float32).reshape(1, cout)
    m = bh * Wa

    if packed:
        kern = partial(_direct_conv_packed_kernel, kh=kh, kw=kw, cin=cin,
                       wa=Wa, bh=bh, relu=relu)
        w_arg = w.reshape(kh * kw * cin, cout).astype(jnp.bfloat16)
        w_spec = pl.BlockSpec((kh * kw * cin, cout), lambda n: (0, 0))
        scratch = [pltpu.VMEM((m, kh * kw * cin), jnp.bfloat16)]
    else:
        kern = partial(_direct_conv_acc_kernel, kh=kh, kw=kw,
                       wa=Wa, bh=bh, relu=relu)
        w_arg = w.reshape(kh * kw, cin, cout).astype(jnp.bfloat16)
        w_spec = pl.BlockSpec((kh * kw, cin, cout), lambda n: (0, 0, 0))
        scratch = [pltpu.VMEM((m, cout), jnp.float32)]

    out = pl.pallas_call(
        kern,
        out_shape=jax.ShapeDtypeStruct((nb * n_bands, m, cout), jnp.bfloat16),
        grid_spec=pltpu.PrefetchScalarGridSpec(
            num_scalar_prefetch=0,
            grid=(nb * n_bands,),
            in_specs=[
                pl.BlockSpec((1, band_rows * Wa, cin), lambda n: (n, 0, 0)),
                w_spec,
                pl.BlockSpec((1, cout), lambda n: (0, 0)),
                pl.BlockSpec((1, cout), lambda n: (0, 0)),
            ],
            out_specs=pl.BlockSpec((1, m, cout), lambda n: (n, 0, 0)),
            scratch_shapes=scratch,
        ),
        compiler_params=pltpu.CompilerParams(
            dimension_semantics=("parallel",),
            vmem_limit_bytes=_VMEM_LIMIT),
    )(xf, w_arg, scale, shift)

    out = out.reshape(nb, n_bands * bh, Wa, cout)
    return out[:, :OH, :OW, :]


def _gap_kernel(x_ref, o_ref):
    # x_ref: (1, H*W, C) bf16 -> o_ref: (1, 1, C) f32
    o_ref[...] = jnp.mean(x_ref[...].astype(jnp.float32), axis=1, keepdims=True)


def global_avg_pool(x):
    """AdaptiveAvgPool2d((1,1)) + squeeze, as a Pallas reduction kernel."""
    N, H, W, C = x.shape
    xr = x.reshape(N, H * W, C)
    out = pl.pallas_call(
        _gap_kernel,
        out_shape=jax.ShapeDtypeStruct((N, 1, C), jnp.float32),
        grid_spec=pltpu.PrefetchScalarGridSpec(
            num_scalar_prefetch=0,
            grid=(N,),
            in_specs=[pl.BlockSpec((1, H * W, C), lambda i: (i, 0, 0))],
            out_specs=pl.BlockSpec((1, 1, C), lambda i: (i, 0, 0)),
        ),
        compiler_params=pltpu.CompilerParams(
            dimension_semantics=("parallel",)),
    )(xr)
    return out.reshape(N, C)


# --------------------------------------------------------------------------
# Conv dispatch / glue (plain JAX feeding the Pallas kernels)
# --------------------------------------------------------------------------
def _im2col(x, kh, kw, stride, padding):
    N, H, W, C = x.shape
    sh, sw = stride
    ph, pw = padding
    xp = jnp.pad(x, ((0, 0), (ph, ph), (pw, pw), (0, 0)))
    OH = (H + 2 * ph - kh) // sh + 1
    OW = (W + 2 * pw - kw) // sw + 1
    cols = []
    for dy in range(kh):
        for dx in range(kw):
            cols.append(xp[:, dy:dy + sh * (OH - 1) + 1:sh,
                           dx:dx + sw * (OW - 1) + 1:sw, :])
    patches = jnp.concatenate(cols, axis=-1)  # (N, OH, OW, kh*kw*C)
    return patches, OH, OW


def conv_1x1(p, x, relu=True):
    nb, H, W, C = x.shape
    cout = p['w'].shape[-1]
    out = fused_matmul_bn_relu(x.reshape(-1, C), p['w'].reshape(C, cout),
                               p['scale'], p['shift'], relu=relu)
    return out.reshape(nb, H, W, cout)


def conv_1x1_multi(plist, x):
    """Horizontally fused 1x1 convs that share the same input x."""
    nb, H, W, C = x.shape
    w = jnp.concatenate([p['w'].reshape(C, -1) for p in plist], axis=1)
    scale = jnp.concatenate([p['scale'] for p in plist])
    shift = jnp.concatenate([p['shift'] for p in plist])
    out = fused_matmul_bn_relu(x.reshape(-1, C), w, scale, shift, relu=True)
    out = out.reshape(nb, H, W, -1)
    outs, off = [], 0
    for p in plist:
        c = p['w'].shape[-1]
        outs.append(out[..., off:off + c])
        off += c
    return outs


def conv_im2col(p, x, relu=True):
    w = p['w']
    kh, kw, cin, cout = w.shape
    patches, OH, OW = _im2col(x, kh, kw, p['stride'], p['padding'])
    nb = x.shape[0]
    lhs = patches.reshape(-1, kh * kw * cin)
    out = fused_matmul_bn_relu(lhs, w.reshape(kh * kw * cin, cout),
                               p['scale'], p['shift'], relu=relu)
    return out.reshape(nb, OH, OW, cout)


def apply_bconv(p, x):
    """BasicConv2d: Conv2d(bias=False) + BatchNorm(eval, eps=1e-3) + ReLU."""
    kh, kw, _, _ = p['w'].shape
    if (kh, kw) == (1, 1) and p['stride'] == (1, 1) and p['padding'] == (0, 0):
        return conv_1x1(p, x)
    if p['stride'] == (1, 1):
        return conv_direct(p, x)
    return conv_im2col(p, x)            # only the few strided convs land here


def max_pool(x, k=3, stride=2, padding=0):
    neg_inf = jnp.array(-jnp.inf, x.dtype)
    return lax.reduce_window(
        x, neg_inf, lax.max,
        (1, k, k, 1), (1, stride, stride, 1),
        [(0, 0), (padding, padding), (padding, padding), (0, 0)])


def avg_pool_nocount(x, k=3, stride=1, padding=1):
    # F.avg_pool2d(..., count_include_pad=False); accumulate in f32.
    pads = [(0, 0), (padding, padding), (padding, padding), (0, 0)]
    xf = x.astype(jnp.float32)
    zero = jnp.array(0, jnp.float32)
    sums = lax.reduce_window(xf, zero, lax.add, (1, k, k, 1),
                             (1, stride, stride, 1), pads)
    ones = jnp.ones(x.shape[:3] + (1,), jnp.float32)
    cnt = lax.reduce_window(ones, zero, lax.add, (1, k, k, 1),
                            (1, stride, stride, 1), pads)
    return (sums / cnt).astype(x.dtype)


def bilinear_resize_nhwc(x, out_h, out_w):
    # Matches F.interpolate(mode='bilinear', align_corners=False) for upsampling.
    N, H, W, C = x.shape

    def grid(in_size, out_size):
        scale = in_size / out_size
        c = (jnp.arange(out_size, dtype=jnp.float32) + 0.5) * scale - 0.5
        c = jnp.clip(c, 0.0, in_size - 1)
        lo = jnp.floor(c).astype(jnp.int32)
        hi = jnp.minimum(lo + 1, in_size - 1)
        frac = c - lo.astype(jnp.float32)
        return lo, hi, frac

    ylo, yhi, fy = grid(H, out_h)
    xlo, xhi, fx = grid(W, out_w)
    top = x[:, ylo, :, :]
    bot = x[:, yhi, :, :]
    fy = fy[None, :, None, None]
    rows = top * (1.0 - fy) + bot * fy
    left = rows[:, :, xlo, :]
    right = rows[:, :, xhi, :]
    fx = fx[None, None, :, None]
    return left * (1.0 - fx) + right * fx


# --------------------------------------------------------------------------
# Deterministic synthetic parameters (shapes match torchvision inception_v3)
# --------------------------------------------------------------------------
class KeyGen:
    def __init__(self, key):
        self.key = key
        self.i = 0

    def __call__(self):
        self.i += 1
        return jax.random.fold_in(self.key, self.i)


def basic_conv(kg, cin, cout, ksize, stride=1, padding=0):
    kh, kw = ksize if isinstance(ksize, tuple) else (ksize, ksize)
    sh, sw = stride if isinstance(stride, tuple) else (stride, stride)
    ph, pw = padding if isinstance(padding, tuple) else (padding, padding)
    fan_in = cin * kh * kw
    w = jax.random.normal(kg(), (kh, kw, cin, cout), jnp.float32) * math.sqrt(2.0 / fan_in)
    gamma = jnp.ones((cout,), jnp.float32)
    beta = jnp.zeros((cout,), jnp.float32)
    mean = jnp.zeros((cout,), jnp.float32)
    var = jnp.ones((cout,), jnp.float32)
    scale = gamma / jnp.sqrt(var + _BN_EPS)
    shift = beta - mean * scale
    return {'w': w.astype(jnp.bfloat16), 'scale': scale, 'shift': shift,
            'stride': (sh, sw), 'padding': (ph, pw)}


def make_inception_a(kg, cin, pool_features):
    return {
        'b1x1': basic_conv(kg, cin, 64, 1),
        'b5x5_1': basic_conv(kg, cin, 48, 1),
        'b5x5_2': basic_conv(kg, 48, 64, 5, padding=2),
        'b3x3dbl_1': basic_conv(kg, cin, 64, 1),
        'b3x3dbl_2': basic_conv(kg, 64, 96, 3, padding=1),
        'b3x3dbl_3': basic_conv(kg, 96, 96, 3, padding=1),
        'bpool': basic_conv(kg, cin, pool_features, 1),
    }


def apply_inception_a(p, x):   # FIDInceptionA: avg pool with count_include_pad=False
    b1, b5_1, b3_1 = conv_1x1_multi([p['b1x1'], p['b5x5_1'], p['b3x3dbl_1']], x)
    b5 = apply_bconv(p['b5x5_2'], b5_1)
    b3 = apply_bconv(p['b3x3dbl_3'], apply_bconv(p['b3x3dbl_2'], b3_1))
    bp = apply_bconv(p['bpool'], avg_pool_nocount(x, 3, 1, 1))
    return jnp.concatenate([b1, b5, b3, bp], axis=-1)


def make_inception_b(kg, cin):
    return {
        'b3x3': basic_conv(kg, cin, 384, 3, stride=2),
        'b3x3dbl_1': basic_conv(kg, cin, 64, 1),
        'b3x3dbl_2': basic_conv(kg, 64, 96, 3, padding=1),
        'b3x3dbl_3': basic_conv(kg, 96, 96, 3, stride=2),
    }


def apply_inception_b(p, x):
    b3 = apply_bconv(p['b3x3'], x)
    bd = apply_bconv(p['b3x3dbl_1'], x)
    bd = apply_bconv(p['b3x3dbl_2'], bd)
    bd = apply_bconv(p['b3x3dbl_3'], bd)
    bp = max_pool(x, 3, 2, 0)
    return jnp.concatenate([b3, bd, bp], axis=-1)


def make_inception_c(kg, cin, c7):
    return {
        'b1x1': basic_conv(kg, cin, 192, 1),
        'b7x7_1': basic_conv(kg, cin, c7, 1),
        'b7x7_2': basic_conv(kg, c7, c7, (1, 7), padding=(0, 3)),
        'b7x7_3': basic_conv(kg, c7, 192, (7, 1), padding=(3, 0)),
        'b7x7dbl_1': basic_conv(kg, cin, c7, 1),
        'b7x7dbl_2': basic_conv(kg, c7, c7, (7, 1), padding=(3, 0)),
        'b7x7dbl_3': basic_conv(kg, c7, c7, (1, 7), padding=(0, 3)),
        'b7x7dbl_4': basic_conv(kg, c7, c7, (7, 1), padding=(3, 0)),
        'b7x7dbl_5': basic_conv(kg, c7, 192, (1, 7), padding=(0, 3)),
        'bpool': basic_conv(kg, cin, 192, 1),
    }


def apply_inception_c(p, x):   # FIDInceptionC
    b1, b7_1, bd = conv_1x1_multi([p['b1x1'], p['b7x7_1'], p['b7x7dbl_1']], x)
    b7 = apply_bconv(p['b7x7_3'], apply_bconv(p['b7x7_2'], b7_1))
    for name in ('b7x7dbl_2', 'b7x7dbl_3', 'b7x7dbl_4', 'b7x7dbl_5'):
        bd = apply_bconv(p[name], bd)
    bp = apply_bconv(p['bpool'], avg_pool_nocount(x, 3, 1, 1))
    return jnp.concatenate([b1, b7, bd, bp], axis=-1)


def make_inception_d(kg, cin):
    return {
        'b3x3_1': basic_conv(kg, cin, 192, 1),
        'b3x3_2': basic_conv(kg, 192, 320, 3, stride=2),
        'b7x7x3_1': basic_conv(kg, cin, 192, 1),
        'b7x7x3_2': basic_conv(kg, 192, 192, (1, 7), padding=(0, 3)),
        'b7x7x3_3': basic_conv(kg, 192, 192, (7, 1), padding=(3, 0)),
        'b7x7x3_4': basic_conv(kg, 192, 192, 3, stride=2),
    }


def apply_inception_d(p, x):
    b3_1, b7_1 = conv_1x1_multi([p['b3x3_1'], p['b7x7x3_1']], x)
    b3 = apply_bconv(p['b3x3_2'], b3_1)
    b7 = apply_bconv(p['b7x7x3_2'], b7_1)
    b7 = apply_bconv(p['b7x7x3_3'], b7)
    b7 = apply_bconv(p['b7x7x3_4'], b7)
    bp = max_pool(x, 3, 2, 0)
    return jnp.concatenate([b3, b7, bp], axis=-1)


def make_inception_e(kg, cin):
    return {
        'b1x1': basic_conv(kg, cin, 320, 1),
        'b3x3_1': basic_conv(kg, cin, 384, 1),
        'b3x3_2a': basic_conv(kg, 384, 384, (1, 3), padding=(0, 1)),
        'b3x3_2b': basic_conv(kg, 384, 384, (3, 1), padding=(1, 0)),
        'b3x3dbl_1': basic_conv(kg, cin, 448, 1),
        'b3x3dbl_2': basic_conv(kg, 448, 384, 3, padding=1),
        'b3x3dbl_3a': basic_conv(kg, 384, 384, (1, 3), padding=(0, 1)),
        'b3x3dbl_3b': basic_conv(kg, 384, 384, (3, 1), padding=(1, 0)),
        'bpool': basic_conv(kg, cin, 192, 1),
    }


def apply_inception_e(p, x, pool_mode):   # FIDInceptionE_1 ('avg') / E_2 ('max')
    b1, b3_in, bd_in = conv_1x1_multi([p['b1x1'], p['b3x3_1'], p['b3x3dbl_1']], x)
    b3 = jnp.concatenate([apply_bconv(p['b3x3_2a'], b3_in),
                          apply_bconv(p['b3x3_2b'], b3_in)], axis=-1)
    bd_in = apply_bconv(p['b3x3dbl_2'], bd_in)
    bd = jnp.concatenate([apply_bconv(p['b3x3dbl_3a'], bd_in),
                          apply_bconv(p['b3x3dbl_3b'], bd_in)], axis=-1)
    if pool_mode == 'avg':
        bp_in = avg_pool_nocount(x, 3, 1, 1)
    else:
        bp_in = max_pool(x, 3, 1, 1)
    bp = apply_bconv(p['bpool'], bp_in)
    return jnp.concatenate([b1, b3, bd, bp], axis=-1)


def make_params(key):
    kg = KeyGen(key)
    return {
        'c1a': basic_conv(kg, 3, 32, 3, stride=2),
        'c2a': basic_conv(kg, 32, 32, 3),
        'c2b': basic_conv(kg, 32, 64, 3, padding=1),
        'c3b': basic_conv(kg, 64, 80, 1),
        'c4a': basic_conv(kg, 80, 192, 3),
        'm5b': make_inception_a(kg, 192, 32),
        'm5c': make_inception_a(kg, 256, 64),
        'm5d': make_inception_a(kg, 288, 64),
        'm6a': make_inception_b(kg, 288),
        'm6b': make_inception_c(kg, 768, 128),
        'm6c': make_inception_c(kg, 768, 160),
        'm6d': make_inception_c(kg, 768, 160),
        'm6e': make_inception_c(kg, 768, 192),
        'm7a': make_inception_d(kg, 768),
        'm7b': make_inception_e(kg, 1280),
        'm7c': make_inception_e(kg, 2048),
    }


# --------------------------------------------------------------------------
# Forward pass (mirrors InceptionV3Features.forward)
# --------------------------------------------------------------------------
def forward(params, x_nchw):
    # input is NCHW float image in [0, 1], like the PyTorch module expects
    x = jnp.transpose(x_nchw, (0, 2, 3, 1)).astype(jnp.float32)   # -> NHWC
    x = bilinear_resize_nhwc(x, 299, 299)                         # F.interpolate bilinear
    x = (2.0 * x - 1.0).astype(jnp.bfloat16)

    x = apply_bconv(params['c1a'], x)          # 299 -> 149  (stride 2, im2col GEMM)
    x = apply_bconv(params['c2a'], x)          # 149 -> 147  (banded direct conv, packed K)
    x = apply_bconv(params['c2b'], x)          # 147 -> 147  (banded direct conv, packed K)
    x = max_pool(x, 3, 2, 0)                   # 147 -> 73
    x = apply_bconv(params['c3b'], x)          # 73          (1x1 GEMM)
    x = apply_bconv(params['c4a'], x)          # 73 -> 71    (banded direct conv, packed K)
    x = max_pool(x, 3, 2, 0)                   # 71 -> 35

    x = apply_inception_a(params['m5b'], x)
    x = apply_inception_a(params['m5c'], x)
    x = apply_inception_a(params['m5d'], x)
    x = apply_inception_b(params['m6a'], x)    # 35 -> 17
    x = apply_inception_c(params['m6b'], x)
    x = apply_inception_c(params['m6c'], x)
    x = apply_inception_c(params['m6d'], x)
    x = apply_inception_c(params['m6e'], x)
    x = apply_inception_d(params['m7a'], x)    # 17 -> 8
    x = apply_inception_e(params['m7b'], x, pool_mode='avg')   # FIDInceptionE_1
    x = apply_inception_e(params['m7c'], x, pool_mode='max')   # FIDInceptionE_2

    x = global_avg_pool(x)                     # AdaptiveAvgPool2d((1,1)) + squeeze
    return x                                   # (N, 2048) float32


if __name__ == "__main__":
    key = jax.random.PRNGKey(0)
    k_params, k_input = jax.random.split(key)

    params = make_params(k_params)

    # Small input consistent with the module: NCHW RGB image batch.
    x = jax.random.uniform(k_input, (2, 3, 16, 16), jnp.float32)

    feats = forward(params, x)
    feats = jax.block_until_ready(feats)

    assert feats.shape == (2, 2048), feats.shape
    assert bool(jnp.all(jnp.isfinite(feats)))
    print("KERNEL_OK")
</pallas_src>

<mosaic_0001>
module attributes {stable_mosaic.version = 11 : i64} {
  func.func @_gemm_bn_act_single_kernel(%arg0: i32, %arg1: i32, %arg2: memref<512x128xbf16, #tpu.memory_space<vmem>>, %arg3: memref<128x128xbf16, #tpu.memory_space<vmem>>, %arg4: memref<1x128xf32, #tpu.memory_space<vmem>>, %arg5: memref<1x128xf32, #tpu.memory_space<vmem>>, %arg6: memref<512x128xbf16, #tpu.memory_space<vmem>>) attributes {dimension_semantics = [#tpu.dimension_semantics<parallel>, #tpu.dimension_semantics<parallel>], iteration_bounds = array<i64: 87, 1>, scalar_prefetch = 0 : i64, scratch_operands = 0 : i64, tpu.core_type = #tpu.core_type<tc>, window_params = [{transform_indices = @transform_0, window_bounds = array<i64: 512, 128>}, {transform_indices = @transform_1, window_bounds = array<i64: 128, 128>}, {transform_indices = @transform_2, window_bounds = array<i64: 1, 128>}, {transform_indices = @transform_3, window_bounds = array<i64: 1, 128>}, {transform_indices = @transform_4, window_bounds = array<i64: 512, 128>}]} {
    %c0 = arith.constant 0 : index
    %c0_0 = arith.constant 0 : index
    %0 = vector.load %arg2[%c0, %c0_0] : memref<512x128xbf16, #tpu.memory_space<vmem>>, vector<512x128xbf16>
    %c0_1 = arith.constant 0 : index
    %c0_2 = arith.constant 0 : index
    %1 = vector.load %arg3[%c0_1, %c0_2] : memref<128x128xbf16, #tpu.memory_space<vmem>>, vector<128x128xbf16>
    %cst = arith.constant dense<0.000000e+00> : vector<512x128xf32>
    %2 = tpu.matmul %0, %1, %cst {dimension_numbers = #tpu.dot_dimension_numbers<[1], [0], [0], [1], [0, 0, 1, 1], [], []>} : vector<512x128xbf16>, vector<128x128xbf16>, vector<512x128xf32> -> vector<512x128xf32>
    %c0_3 = arith.constant 0 : index
    %c0_4 = arith.constant 0 : index
    %3 = vector.load %arg4[%c0_3, %c0_4] : memref<1x128xf32, #tpu.memory_space<vmem>>, vector<1x128xf32>
    %4 = vector.broadcast %3 : vector<1x128xf32> to vector<512x128xf32>
    %5 = arith.mulf %2, %4 : vector<512x128xf32>
    %c0_5 = arith.constant 0 : index
    %c0_6 = arith.constant 0 : index
    %6 = vector.load %arg5[%c0_5, %c0_6] : memref<1x128xf32, #tpu.memory_space<vmem>>, vector<1x128xf32>
    %7 = vector.broadcast %6 : vector<1x128xf32> to vector<512x128xf32>
    %8 = arith.addf %5, %7 : vector<512x128xf32>
    %cst_7 = arith.constant 0.000000e+00 : f32
    %9 = vector.broadcast %cst_7 : f32 to vector<512x128xf32>
    %10 = arith.maximumf %8, %9 : vector<512x128xf32>
    %11 = arith.truncf %10 : vector<512x128xf32> to vector<512x128xbf16>
    %c0_8 = arith.constant 0 : index
    %c0_9 = arith.constant 0 : index
    %12 = vector.load %arg6[%c0_8, %c0_9] : memref<512x128xbf16, #tpu.memory_space<vmem>>, vector<512x128xbf16>
    tpu.vector_store %arg6[%c0_8, %c0_9], %11 {strides = array<i32>} : memref<512x128xbf16, #tpu.memory_space<vmem>>, vector<512x128xbf16>,
    return
  }
  func.func @transform_0(%arg0: i32, %arg1: i32) -> (i32, i32) {
    %c0_i32 = arith.constant 0 : i32
    %c0_i32_0 = arith.constant 0 : i32
    return %arg0, %c0_i32 : i32, i32
  }
  func.func @transform_1(%arg0: i32, %arg1: i32) -> (i32, i32) {
    %c0_i32 = arith.constant 0 : i32
    %c0_i32_0 = arith.constant 0 : i32
    return %c0_i32, %arg1 : i32, i32
  }
  func.func @transform_2(%arg0: i32, %arg1: i32) -> (i32, i32) {
    %c0_i32 = arith.constant 0 : i32
    %c0_i32_0 = arith.constant 0 : i32
    return %c0_i32, %arg1 : i32, i32
  }
  func.func @transform_3(%arg0: i32, %arg1: i32) -> (i32, i32) {
    %c0_i32 = arith.constant 0 : i32
    %c0_i32_0 = arith.constant 0 : i32
    return %c0_i32, %arg1 : i32, i32
  }
  func.func @transform_4(%arg0: i32, %arg1: i32) -> (i32, i32) {
    %c0_i32 = arith.constant 0 : i32
    return %arg0, %arg1 : i32, i32
  }
}

</mosaic_0001>

<llo_original>
// kernel: tpu_custom_call.1
$region0: #{tpu_custom_call.1}
  #allocation0 [shape = 'u32[]', space=smem, size = 0x4, offset = 0x4, fixed_abs, tag = 'smem constant byte address 0x4 - core index']
  #allocation1 [shape = 'u32[144,128]{1,0:T(1,128)}', space=vmem, size = 0x12000, scoped, tag = 'internal scratch']
  %s0 = inlined_call_operand.hbm [shape: bf16[44544,128], index: 0, kind: input, shape index: {}]
  %s1 = inlined_call_operand.hbm [shape: bf16[128,128], index: 1, kind: input, shape index: {}]
  %s2 = inlined_call_operand.hbm [shape: f32[1,128], index: 2, kind: input, shape index: {}]
  %s3 = inlined_call_operand.hbm [shape: f32[1,128], index: 3, kind: input, shape index: {}]
  %s4 = inlined_call_operand.hbm [shape: bf16[44544,128], index: 4, kind: output, shape index: {}]
  %s5 = sld [smem:[#allocation0]]
  $region65: #{tpu_custom_call.1} parent=0
    _
  %s7 = ssub.s32 1, %s5
  %s8 = scalar_select 0, %s7, %s5
  $region1: #{tpu_custom_call.1} parent=0
    #allocation2 [shape = 'u8[262144]{0}', space=vmem, size = 0x40000, scoped, tag = 'input window, operand 0']
    #allocation3 [shape = 's32[2]{0}', space=sflag, size = 0x8, scoped, tag = 'scoped memory for tpu_custom_call.1']
    #allocation4 [shape = 's32[2]{0}', space=sflag, size = 0x8, scoped, tag = 'scoped memory for tpu_custom_call.1']
    #allocation5 [shape = 'u8[32768]{0}', space=vmem, size = 0x8000, scoped, tag = 'input window, operand 1, single buffered']
    #allocation6 [shape = 's32[1]{0}', space=sflag, size = 0x4, scoped, tag = 'scoped memory for tpu_custom_call.1']
    #allocation7 [shape = 'u8[512]{0}', space=vmem, size = 0x400, scoped, tag = 'input window, operand 2, single buffered']
    #allocation8 [shape = 'u8[512]{0}', space=vmem, size = 0x400, scoped, tag = 'input window, operand 3, single buffered']
    #allocation9 [shape = 's32[1]{0}', space=sflag, size = 0x4, scoped, tag = 'scoped memory for tpu_custom_call.1']
    #allocation10 [shape = 'u8[262144]{0}', space=vmem, size = 0x40000, scoped, tag = 'output window, operand 0']
    %9 = vsyncpa [#allocation3], 0
    %s10 = scalar_lea.sflag [#allocation3], 1
    %11 = vsyncpa %s10, 0
    %12 = vsyncpa [#allocation6], 0
    %13 = vsyncpa [#allocation9], 0
    %14 = vsyncpa [#allocation4], 0
    %s15 = scalar_lea.sflag [#allocation4], 1
    %16 = vsyncpa %s15, 0
    loop: start=0, step=1, limit=89
    $region2: #{tpu_custom_call.1} parent=1 // loop_pre_header
      _
    $region3: #{tpu_custom_call.1} parent=1 // loop_header
      %s18 = sphi 0, %s22
      %p19 = scmp.ge.s32.totalorder %s18, 89
      %s25 = sphi 0, %s37
      %s26 = sphi 0, %s33
      %s27 = sphi 0, %s25
      %s28 = sphi 0, %s26
      %s29 = sphi 0, %s27
      %s30 = sphi 0, %s28
      %s40 = sphi 0, %s42
      %s43 = sphi 0, %s40
      %s44 = sphi 0, %s43
      %s60 = sphi 0, %s44
      %s66 = sphi 0, %s68
      %s69 = sphi 0, %s66
      %s70 = sphi 0, %s69
      %s86 = sphi 0, %s70
      %s92 = sphi 0, %s94
      %s95 = sphi 0, %s92
      %s96 = sphi 0, %s95
      %s112 = sphi 0, %s96
      %s118 = sphi 0, %s120
      %s121 = sphi 0, %s118
      %s122 = sphi 0, %s121
      %s138 = sphi 0, %s122
      %s146 = sphi 0, %s148
      %s149 = sphi 0, %s146
      %s150 = sphi 0, %s149
      %s166 = sphi 0, %s150
    $region4: #{tpu_custom_call.1} parent=1 // loop_header_branch
      %21 = sbr.rel (%p19) target = $region8
    $region5: #{tpu_custom_call.1} parent=1 // loop_body
      %s23 = ssub.s32 %s18, 1
      %s24 = ssub.s32 %s18, 2
      %s31 = sadd.s32 1, %s26
      %p32 = scmp.ge.s32.totalorder %s31, 1
      %s33 = scalar_select %p32, 0, %s31
      %s34 = sadd.s32 1, %s25
      %s35 = scalar_select %p32, %s34, %s25
      %p36 = scmp.ge.s32.totalorder %s35, 87
      %s37 = scalar_select %p36, 0, %s35
      %s38 = ssub.s32 %s25, %s37
      %p39 = scmp.eq.s32.totalorder %s38, 0
      %s41 = sadd.s32 %s40, 1
      %s42 = scalar_select %p39, %s40, %s41
      %p45 = pneg %p39
      %p46 = scmp.eq.s32.totalorder %s18, 86
      %p47 = por %p45, %p46
      %p48 = scmp.ne.s32.totalorder %s40, %s43
      %p49 = scmp.eq.s32.totalorder %s18, 0
      %p50 = por %p48, %p49
      %p51 = scmp.ne.s32.totalorder %s40, %s43
      %p52 = scmp.eq.s32.totalorder %s23, 86
      %p53 = por %p51, %p52
      %p54 = scmp.ne.s32.totalorder %s43, %s44
      %p55 = scmp.eq.s32.totalorder %s23, 0
      %p56 = por %p54, %p55
      %p57 = scmp.ne.s32.totalorder %s43, %s44
      %p58 = scmp.eq.s32.totalorder %s24, 86
      %p59 = por %p57, %p58
      %p61 = scmp.ne.s32.totalorder %s44, %s60
      %p62 = scmp.eq.s32.totalorder %s24, 0
      %p63 = por %p61, %p62
      %s64 = ssub.s32 %s26, %s33
      %p65 = scmp.eq.s32.totalorder %s64, 0
      %s67 = sadd.s32 %s66, 1
      %s68 = scalar_select %p65, %s66, %s67
      %p71 = pneg %p65
      %p72 = scmp.eq.s32.totalorder %s18, 86
      %p73 = por %p71, %p72
      %p74 = scmp.ne.s32.totalorder %s66, %s69
      %p75 = scmp.eq.s32.totalorder %s18, 0
      %p76 = por %p74, %p75
      %p77 = scmp.ne.s32.totalorder %s66, %s69
      %p78 = scmp.eq.s32.totalorder %s23, 86
      %p79 = por %p77, %p78
      %p80 = scmp.ne.s32.totalorder %s69, %s70
      %p81 = scmp.eq.s32.totalorder %s23, 0
      %p82 = por %p80, %p81
      %p83 = scmp.ne.s32.totalorder %s69, %s70
      %p84 = scmp.eq.s32.totalorder %s24, 86
      %p85 = por %p83, %p84
      %p87 = scmp.ne.s32.totalorder %s70, %s86
      %p88 = scmp.eq.s32.totalorder %s24, 0
      %p89 = por %p87, %p88
      %s90 = ssub.s32 %s26, %s33
      %p91 = scmp.eq.s32.totalorder %s90, 0
      %s93 = sadd.s32 %s92, 1
      %s94 = scalar_select %p91, %s92, %s93
      %p97 = pneg %p91
      %p98 = scmp.eq.s32.totalorder %s18, 86
      %p99 = por %p97, %p98
      %p100 = scmp.ne.s32.totalorder %s92, %s95
      %p101 = scmp.eq.s32.totalorder %s18, 0
      %p102 = por %p100, %p101
      %p103 = scmp.ne.s32.totalorder %s92, %s95
      %p104 = scmp.eq.s32.totalorder %s23, 86
      %p105 = por %p103, %p104
      %p106 = scmp.ne.s32.totalorder %s95, %s96
      %p107 = scmp.eq.s32.totalorder %s23, 0
      %p108 = por %p106, %p107
      %p109 = scmp.ne.s32.totalorder %s95, %s96
      %p110 = scmp.eq.s32.totalorder %s24, 86
      %p111 = por %p109, %p110
      %p113 = scmp.ne.s32.totalorder %s96, %s112
      %p114 = scmp.eq.s32.totalorder %s24, 0
      %p115 = por %p113, %p114
      %s116 = ssub.s32 %s26, %s33
      %p117 = scmp.eq.s32.totalorder %s116, 0
      %s119 = sadd.s32 %s118, 1
      %s120 = scalar_select %p117, %s118, %s119
      %p123 = pneg %p117
      %p124 = scmp.eq.s32.totalorder %s18, 86
      %p125 = por %p123, %p124
      %p126 = scmp.ne.s32.totalorder %s118, %s121
      %p127 = scmp.eq.s32.totalorder %s18, 0
      %p128 = por %p126, %p127
      %p129 = scmp.ne.s32.totalorder %s118, %s121
      %p130 = scmp.eq.s32.totalorder %s23, 86
      %p131 = por %p129, %p130
      %p132 = scmp.ne.s32.totalorder %s121, %s122
      %p133 = scmp.eq.s32.totalorder %s23, 0
      %p134 = por %p132, %p133
      %p135 = scmp.ne.s32.totalorder %s121, %s122
      %p136 = scmp.eq.s32.totalorder %s24, 86
      %p137 = por %p135, %p136
      %p139 = scmp.ne.s32.totalorder %s122, %s138
      %p140 = scmp.eq.s32.totalorder %s24, 0
      %p141 = por %p139, %p140
      %s142 = ssub.s32 %s25, %s37
      %s143 = ssub.s32 %s26, %s33
      %s144 = sor.u32 %s142, %s143
      %p145 = scmp.eq.s32.totalorder %s144, 0
      %s147 = sadd.s32 %s146, 1
      %s148 = scalar_select %p145, %s146, %s147
      %p151 = pneg %p145
      %p152 = scmp.eq.s32.totalorder %s18, 86
      %p153 = por %p151, %p152
      %p154 = scmp.ne.s32.totalorder %s146, %s149
      %p155 = scmp.eq.s32.totalorder %s18, 0
      %p156 = por %p154, %p155
      %p157 = scmp.ne.s32.totalorder %s146, %s149
      %p158 = scmp.eq.s32.totalorder %s23, 86
      %p159 = por %p157, %p158
      %p160 = scmp.ne.s32.totalorder %s149, %s150
      %p161 = scmp.eq.s32.totalorder %s23, 0
      %p162 = por %p160, %p161
      %p163 = scmp.ne.s32.totalorder %s149, %s150
      %p164 = scmp.eq.s32.totalorder %s24, 86
      %p165 = por %p163, %p164
      %p167 = scmp.ne.s32.totalorder %s150, %s166
      %p168 = scmp.eq.s32.totalorder %s24, 0
      %p169 = por %p167, %p168
      %p170 = scmp.le.s32.totalorder 1, %s18
      %p171 = scmp.lt.s32.totalorder %s18, 88
      %p172 = pnand %p170, %p171
      %p173 = pneg %p172
      // Predicated region
      $region9: #{tpu_custom_call.1} parent=5 // pred_check
        _
      $region10: #{tpu_custom_call.1} parent=5 // pred_check_branch
        %175 = sbr.rel (%p172) target = $region12
      $region11: #{tpu_custom_call.1} parent=5 // pred_region
        %s176 = ssub.s32 %s18, 1
        // Predicated region
        $region13: #{tpu_custom_call.1} parent=11 // pred_check
          %p177 = pneg %p82
        $region14: #{tpu_custom_call.1} parent=11 // pred_check_branch
          %179 = sbr.rel (%p177) target = $region16
        $region15: #{tpu_custom_call.1} parent=11 // pred_region
          %s181 = ssub.s32 1024, 1024
          %182 = vsyncadd [#allocation6], %s181
          %s183 = smul.addr %s28, 64
          %s184 = scalar_lea.hbm %s1, %s183
          %s185 = sshll.u32 [#allocation5], 4
          %s186 = int_to_ptr.vmem [resolvable:$true] %s185
          %191 = dma.hbm_to_vmem [thread:$0]  %s184, 1024, %s186, [#allocation6], 64, 64, 4
        $region16: #{tpu_custom_call.1} parent=11 // pred_fallthru
          _
        // Predicated region
        $region17: #{tpu_custom_call.1} parent=11 // pred_check
          %p192 = pneg %p108
        $region18: #{tpu_custom_call.1} parent=11 // pred_check_branch
          %194 = sbr.rel (%p192) target = $region20
        $region19: #{tpu_custom_call.1} parent=11 // pred_region
          %s196 = ssub.s32 16, 16
          %197 = vsyncadd [#allocation6], %s196
          %s198 = smul.addr %s28, 16
          %s199 = scalar_lea.hbm %s2, %s198
          %s201 = sshll.u32 [#allocation7], 4
          %s202 = int_to_ptr.vmem [resolvable:$true] %s201
          %204 = dma.hbm_to_vmem [thread:$0]  %s199, 16, %s202, [#allocation6]
        $region20: #{tpu_custom_call.1} parent=11 // pred_fallthru
          _
        // Predicated region
        $region21: #{tpu_custom_call.1} parent=11 // pred_check
          %p205 = pneg %p134
        $region22: #{tpu_custom_call.1} parent=11 // pred_check_branch
          %207 = sbr.rel (%p205) target = $region24
        $region23: #{tpu_custom_call.1} parent=11 // pred_region
          %s209 = ssub.s32 16, 16
          %210 = vsyncadd [#allocation9], %s209
          %s211 = smul.addr %s28, 16
          %s212 = scalar_lea.hbm %s3, %s211
          %s214 = sshll.u32 [#allocation8], 4
          %s215 = int_to_ptr.vmem [resolvable:$true] %s214
          %217 = dma.hbm_to_vmem [thread:$0]  %s212, 16, %s215, [#allocation9]
        $region24: #{tpu_custom_call.1} parent=11 // pred_fallthru
          _
      $region12: #{tpu_custom_call.1} parent=5 // pred_fallthru
        _
      %p218 = scmp.lt.s32.totalorder %s18, 87
      // Predicated region
      $region25: #{tpu_custom_call.1} parent=5 // pred_check
        %p219 = pneg %p218
      $region26: #{tpu_custom_call.1} parent=5 // pred_check_branch
        %221 = sbr.rel (%p219) target = $region28
      $region27: #{tpu_custom_call.1} parent=5 // pred_region
        // Predicated region
        $region29: #{tpu_custom_call.1} parent=27 // pred_check
          %p222 = pneg %p50
        $region30: #{tpu_custom_call.1} parent=27 // pred_check_branch
          %224 = sbr.rel (%p222) target = $region32
        $region31: #{tpu_custom_call.1} parent=27 // pred_region
          %s225 = sand.u32 %s40, 1
          %s226 = scalar_lea.sflag [#allocation3], %s225
          %s227 = sand.u32 %s40, 1
          %s228 = smul.addr %s227, 256
          %s229 = scalar_lea.vmem [#allocation2], %s228
          %s230 = smul.u32 64, %s25
          %s232 = ssub.s32 4096, 4096
          %233 = vsyncadd %s226, %s232
          %s234 = smul.addr %s230, 64
          %s235 = scalar_lea.hbm %s0, %s234
          %s236 = sshll.u32 %s229, 4
          %s237 = int_to_ptr.vmem [resolvable:$true] %s236
          %242 = dma.hbm_to_vmem [thread:$0]  %s235, 4096, %s237, %s226, 64, 64, 4
        $region32: #{tpu_custom_call.1} parent=27 // pred_fallthru
          _
      $region28: #{tpu_custom_call.1} parent=5 // pred_fallthru
        _
      %p243 = scmp.le.s32.totalorder 1, %s18
      %p244 = scmp.lt.s32.totalorder %s18, 88
      %p245 = pnand %p243, %p244
      %p246 = pneg %p245
      // Predicated region
      $region33: #{tpu_custom_call.1} parent=5 // pred_check
        _
      $region34: #{tpu_custom_call.1} parent=5 // pred_check_branch
        %248 = sbr.rel (%p245) target = $region36
      $region35: #{tpu_custom_call.1} parent=5 // pred_region
        %s249 = ssub.s32 %s18, 1
        %s250 = sand.u32 %s43, 1
        %s251 = scalar_lea.sflag [#allocation3], %s250
        %s252 = sand.u32 %s43, 1
        %s253 = smul.addr %s252, 256
        %s254 = scalar_lea.vmem [#allocation2], %s253
        // Predicated region
        $region37: #{tpu_custom_call.1} parent=35 // pred_check
          %p255 = pneg %p56
        $region38: #{tpu_custom_call.1} parent=35 // pred_check_branch
          %257 = sbr.rel (%p255) target = $region40
        $region39: #{tpu_custom_call.1} parent=35 // pred_region
          %258 = dma.done %s251, 4096
        $region40: #{tpu_custom_call.1} parent=35 // pred_fallthru
          _
        // Predicated region
        $region41: #{tpu_custom_call.1} parent=35 // pred_check
          %p259 = pneg %p82
        $region42: #{tpu_custom_call.1} parent=35 // pred_check_branch
          %261 = sbr.rel (%p259) target = $region44
        $region43: #{tpu_custom_call.1} parent=35 // pred_region
          %262 = dma.done [#allocation6], 1024
        $region44: #{tpu_custom_call.1} parent=35 // pred_fallthru
          _
        // Predicated region
        $region45: #{tpu_custom_call.1} parent=35 // pred_check
          %p263 = pneg %p108
        $region46: #{tpu_custom_call.1} parent=35 // pred_check_branch
          %265 = sbr.rel (%p263) target = $region48
        $region47: #{tpu_custom_call.1} parent=35 // pred_region
          %266 = dma.done [#allocation6], 16
        $region48: #{tpu_custom_call.1} parent=35 // pred_fallthru
          _
        // Predicated region
        $region49: #{tpu_custom_call.1} parent=35 // pred_check
          %p267 = pneg %p134
        $region50: #{tpu_custom_call.1} parent=35 // pred_check_branch
          %269 = sbr.rel (%p267) target = $region52
        $region51: #{tpu_custom_call.1} parent=35 // pred_region
          %270 = dma.done [#allocation9], 16
        $region52: #{tpu_custom_call.1} parent=35 // pred_fallthru
          _
        %s271 = sand.u32 %s43, 1
        %s272 = scalar_lea.sflag [#allocation3], %s271
        %s273 = sand.u32 %s43, 1
        %s274 = smul.addr %s273, 256
        %s275 = scalar_lea.vmem [#allocation2], %s274
        %p276 = pneg %p56
        %p277 = pneg %p53
        %p278 = pneg %p82
        %p279 = pneg %p79
        %p280 = pneg %p108
        %p281 = pneg %p105
        %p282 = pneg %p134
        %p283 = pneg %p131
        %p284 = pneg %p162
        %p285 = pneg %p159
        %s286 = sand.u32 %s149, 1
        %s287 = scalar_lea.sflag [#allocation4], %s286
        %s288 = sand.u32 %s149, 1
        %s289 = smul.addr %s288, 256
        %s290 = scalar_lea.vmem [#allocation10], %s289
        %s291 = smul.u32 64, %s27
        %s292 = smul.u32 64, %s27
        %v294 = vld [vmem:[%s254] sm:$0xf]
        %v295 = vld [vmem:[%s254 + $0x4] sm:$0xf]
        %v296 = vld [vmem:[%s254 + $0x8] sm:$0xf]
        %v297 = vld [vmem:[%s254 + $0xc] sm:$0xf]
        %v298 = vld [vmem:[%s254 + $0x10] sm:$0xf]
        %v299 = vld [vmem:[%s254 + $0x14] sm:$0xf]
        %v300 = vld [vmem:[%s254 + $0x18] sm:$0xf]
        %v301 = vld [vmem:[%s254 + $0x1c] sm:$0xf]
        %v302 = vld [vmem:[%s254 + $0x20] sm:$0xf]
        %v303 = vld [vmem:[%s254 + $0x24] sm:$0xf]
        %v304 = vld [vmem:[%s254 + $0x28] sm:$0xf]
        %v305 = vld [vmem:[%s254 + $0x2c] sm:$0xf]
        %v306 = vld [vmem:[%s254 + $0x30] sm:$0xf]
        %v307 = vld [vmem:[%s254 + $0x34] sm:$0xf]
        %v308 = vld [vmem:[%s254 + $0x38] sm:$0xf]
        %v309 = vld [vmem:[%s254 + $0x3c] sm:$0xf]
        %v310 = vld [vmem:[%s254 + $0x40] sm:$0xf]
        %v311 = vld [vmem:[%s254 + $0x44] sm:$0xf]
        %v312 = vld [vmem:[%s254 + $0x48] sm:$0xf]
        %v313 = vld [vmem:[%s254 + $0x4c] sm:$0xf]
        %v314 = vld [vmem:[%s254 + $0x50] sm:$0xf]
        %v315 = vld [vmem:[%s254 + $0x54] sm:$0xf]
        %v316 = vld [vmem:[%s254 + $0x58] sm:$0xf]
        %v317 = vld [vmem:[%s254 + $0x5c] sm:$0xf]
        %v318 = vld [vmem:[%s254 + $0x60] sm:$0xf]
        %v319 = vld [vmem:[%s254 + $0x64] sm:$0xf]
        %v320 = vld [vmem:[%s254 + $0x68] sm:$0xf]
        %v321 = vld [vmem:[%s254 + $0x6c] sm:$0xf]
        %v322 = vld [vmem:[%s254 + $0x70] sm:$0xf]
        %v323 = vld [vmem:[%s254 + $0x74] sm:$0xf]
        %v324 = vld [vmem:[%s254 + $0x78] sm:$0xf]
        %v325 = vld [vmem:[%s254 + $0x7c] sm:$0xf]
        %v326 = vld [vmem:[%s254 + $0x80] sm:$0xf]
        %v327 = vld [vmem:[%s254 + $0x84] sm:$0xf]
        %v328 = vld [vmem:[%s254 + $0x88] sm:$0xf]
        %v329 = vld [vmem:[%s254 + $0x8c] sm:$0xf]
        %v330 = vld [vmem:[%s254 + $0x90] sm:$0xf]
        %v331 = vld [vmem:[%s254 + $0x94] sm:$0xf]
        %v332 = vld [vmem:[%s254 + $0x98] sm:$0xf]
        %v333 = vld [vmem:[%s254 + $0x9c] sm:$0xf]
        %v334 = vld [vmem:[%s254 + $0xa0] sm:$0xf]
        %v335 = vld [vmem:[%s254 + $0xa4] sm:$0xf]
        %v336 = vld [vmem:[%s254 + $0xa8] sm:$0xf]
        %v337 = vld [vmem:[%s254 + $0xac] sm:$0xf]
        %v338 = vld [vmem:[%s254 + $0xb0] sm:$0xf]
        %v339 = vld [vmem:[%s254 + $0xb4] sm:$0xf]
        %v340 = vld [vmem:[%s254 + $0xb8] sm:$0xf]
        %v341 = vld [vmem:[%s254 + $0xbc] sm:$0xf]
        %v342 = vld [vmem:[%s254 + $0xc0] sm:$0xf]
        %v343 = vld [vmem:[%s254 + $0xc4] sm:$0xf]
        %v344 = vld [vmem:[%s254 + $0xc8] sm:$0xf]
        %v345 = vld [vmem:[%s254 + $0xcc] sm:$0xf]
        %v346 = vld [vmem:[%s254 + $0xd0] sm:$0xf]
        %v347 = vld [vmem:[%s254 + $0xd4] sm:$0xf]
        %v348 = vld [vmem:[%s254 + $0xd8] sm:$0xf]
        %v349 = vld [vmem:[%s254 + $0xdc] sm:$0xf]
        %v350 = vld [vmem:[%s254 + $0xe0] sm:$0xf]
        %v351 = vld [vmem:[%s254 + $0xe4] sm:$0xf]
        %v352 = vld [vmem:[%s254 + $0xe8] sm:$0xf]
        %v353 = vld [vmem:[%s254 + $0xec] sm:$0xf]
        %v354 = vld [vmem:[%s254 + $0xf0] sm:$0xf]
        %v355 = vld [vmem:[%s254 + $0xf4] sm:$0xf]
        %v356 = vld [vmem:[%s254 + $0xf8] sm:$0xf]
        %v357 = vld [vmem:[%s254 + $0xfc] sm:$0xf]
        %v358 = vld [vmem:[#allocation5] sm:$0xf]
        %v359 = vld [vmem:[#allocation5 + $0x4] sm:$0xf]
        %v360 = vld [vmem:[#allocation5 + $0x8] sm:$0xf]
        %v361 = vld [vmem:[#allocation5 + $0xc] sm:$0xf]
        %v362 = vld [vmem:[#allocation5 + $0x10] sm:$0xf]
        %v363 = vld [vmem:[#allocation5 + $0x14] sm:$0xf]
        %v364 = vld [vmem:[#allocation5 + $0x18] sm:$0xf]
        %v365 = vld [vmem:[#allocation5 + $0x1c] sm:$0xf]
        %v366 = vld [vmem:[#allocation5 + $0x20] sm:$0xf]
        %v367 = vld [vmem:[#allocation5 + $0x24] sm:$0xf]
        %v368 = vld [vmem:[#allocation5 + $0x28] sm:$0xf]
        %v369 = vld [vmem:[#allocation5 + $0x2c] sm:$0xf]
        %v370 = vld [vmem:[#allocation5 + $0x30] sm:$0xf]
        %v371 = vld [vmem:[#allocation5 + $0x34] sm:$0xf]
        %v372 = vld [vmem:[#allocation5 + $0x38] sm:$0xf]
        %v373 = vld [vmem:[#allocation5 + $0x3c] sm:$0xf]
        %v438 = vunpack.c.l.b16 %v294
        %v439 = vunpack.c.l.b16 %v295
        %v440 = vunpack.c.l.b16 %v296
        %v441 = vunpack.c.l.b16 %v297
        %v442 = vunpack.c.l.b16 %v298
        %v443 = vunpack.c.l.b16 %v299
        %v444 = vunpack.c.l.b16 %v300
        %v445 = vunpack.c.l.b16 %v301
        %v446 = vunpack.c.l.b16 %v302
        %v447 = vunpack.c.l.b16 %v303
        %v448 = vunpack.c.l.b16 %v304
        %v449 = vunpack.c.l.b16 %v305
        %v450 = vunpack.c.l.b16 %v306
        %v451 = vunpack.c.l.b16 %v307
        %v452 = vunpack.c.l.b16 %v308
        %v453 = vunpack.c.l.b16 %v309
        %v454 = vunpack.c.l.b16 %v310
        %v455 = vunpack.c.l.b16 %v311
        %v456 = vunpack.c.l.b16 %v312
        %v457 = vunpack.c.l.b16 %v313
        %v458 = vunpack.c.l.b16 %v314
        %v459 = vunpack.c.l.b16 %v315
        %v460 = vunpack.c.l.b16 %v316
        %v461 = vunpack.c.l.b16 %v317
        %v462 = vunpack.c.l.b16 %v318
        %v463 = vunpack.c.l.b16 %v319
        %v464 = vunpack.c.l.b16 %v320
        %v465 = vunpack.c.l.b16 %v321
        %v466 = vunpack.c.l.b16 %v322
        %v467 = vunpack.c.l.b16 %v323
        %v468 = vunpack.c.l.b16 %v324
        %v469 = vunpack.c.l.b16 %v325
        %v470 = vunpack.c.l.b16 %v326
        %v471 = vunpack.c.l.b16 %v327
        %v472 = vunpack.c.l.b16 %v328
        %v473 = vunpack.c.l.b16 %v329
        %v474 = vunpack.c.l.b16 %v330
        %v475 = vunpack.c.l.b16 %v331
        %v476 = vunpack.c.l.b16 %v332
        %v477 = vunpack.c.l.b16 %v333
        %v478 = vunpack.c.l.b16 %v334
        %v479 = vunpack.c.l.b16 %v335
        %v480 = vunpack.c.l.b16 %v336
        %v481 = vunpack.c.l.b16 %v337
        %v482 = vunpack.c.l.b16 %v338
        %v483 = vunpack.c.l.b16 %v339
        %v484 = vunpack.c.l.b16 %v340
        %v485 = vunpack.c.l.b16 %v341
        %v486 = vunpack.c.l.b16 %v342
        %v487 = vunpack.c.l.b16 %v343
        %v488 = vunpack.c.l.b16 %v344
        %v489 = vunpack.c.l.b16 %v345
        %v490 = vunpack.c.l.b16 %v346
        %v491 = vunpack.c.l.b16 %v347
        %v492 = vunpack.c.l.b16 %v348
        %v493 = vunpack.c.l.b16 %v349
        %v494 = vunpack.c.l.b16 %v350
        %v495 = vunpack.c.l.b16 %v351
        %v496 = vunpack.c.l.b16 %v352
        %v497 = vunpack.c.l.b16 %v353
        %v498 = vunpack.c.l.b16 %v354
        %v499 = vunpack.c.l.b16 %v355
        %v500 = vunpack.c.l.b16 %v356
        %v501 = vunpack.c.l.b16 %v357
        %v502 = vpack.c.b16 %v439, %v438
        %v503 = vpack.c.b16 %v441, %v440
        %v504 = vpack.c.b16 %v443, %v442
        %v505 = vpack.c.b16 %v445, %v444
        %v506 = vpack.c.b16 %v447, %v446
        %v507 = vpack.c.b16 %v449, %v448
        %v508 = vpack.c.b16 %v451, %v450
        %v509 = vpack.c.b16 %v453, %v452
        %v510 = vpack.c.b16 %v455, %v454
        %v511 = vpack.c.b16 %v457, %v456
        %v512 = vpack.c.b16 %v459, %v458
        %v513 = vpack.c.b16 %v461, %v460
        %v514 = vpack.c.b16 %v463, %v462
        %v515 = vpack.c.b16 %v465, %v464
        %v516 = vpack.c.b16 %v467, %v466
        %v517 = vpack.c.b16 %v469, %v468
        %v518 = vpack.c.b16 %v471, %v470
        %v519 = vpack.c.b16 %v473, %v472
        %v520 = vpack.c.b16 %v475, %v474
        %v521 = vpack.c.b16 %v477, %v476
        %v522 = vpack.c.b16 %v479, %v478
        %v523 = vpack.c.b16 %v481, %v480
        %v524 = vpack.c.b16 %v483, %v482
        %v525 = vpack.c.b16 %v485, %v484
        %v526 = vpack.c.b16 %v487, %v486
        %v527 = vpack.c.b16 %v489, %v488
        %v528 = vpack.c.b16 %v491, %v490
        %v529 = vpack.c.b16 %v493, %v492
        %v530 = vpack.c.b16 %v495, %v494
        %v531 = vpack.c.b16 %v497, %v496
        %v532 = vpack.c.b16 %v499, %v498
        %v533 = vpack.c.b16 %v501, %v500
        %v582 = vunpack.c.l.b16 %v358
        %v583 = vunpack.c.l.b16 %v359
        %v584 = vunpack.c.l.b16 %v360
        %v585 = vunpack.c.l.b16 %v361
        %v586 = vunpack.c.l.b16 %v362
        %v587 = vunpack.c.l.b16 %v363
        %v588 = vunpack.c.l.b16 %v364
        %v589 = vunpack.c.l.b16 %v365
        %v590 = vunpack.c.l.b16 %v366
        %v591 = vunpack.c.l.b16 %v367
        %v592 = vunpack.c.l.b16 %v368
        %v593 = vunpack.c.l.b16 %v369
        %v594 = vunpack.c.l.b16 %v370
        %v595 = vunpack.c.l.b16 %v371
        %v596 = vunpack.c.l.b16 %v372
        %v597 = vunpack.c.l.b16 %v373
        %v598 = vpack.c.b16 %v583, %v582
        %v599 = vpack.c.b16 %v585, %v584
        %v600 = vpack.c.b16 %v587, %v586
        %v601 = vpack.c.b16 %v589, %v588
        %v602 = vpack.c.b16 %v591, %v590
        %v603 = vpack.c.b16 %v593, %v592
        %v604 = vpack.c.b16 %v595, %v594
        %v605 = vpack.c.b16 %v597, %v596
        %614 = vmatprep.subr.bf16.mxu0 0
        %615 = vmatpush1.bf16.msra.mxu0 %v598
        %616 = vmatprep.subr.bf16.mxu0 0
        %617 = vmatpush1.bf16.msra.mxu0 %v599
        %618 = vmatprep.subr.bf16.mxu0 0
        %619 = vmatpush1.bf16.msra.mxu0 %v600
        %620 = vmatprep.subr.bf16.mxu0 0
        %621 = vmatpush1.bf16.msra.mxu0 %v601
        %622 = vmatprep.subr.bf16.mxu0 0
        %623 = vmatpush1.bf16.msra.mxu0 %v602
        %624 = vmatprep.subr.bf16.mxu0 0
        %625 = vmatpush1.bf16.msra.mxu0 %v603
        %626 = vmatprep.subr.bf16.mxu0 0
        %627 = vmatpush1.bf16.msra.mxu0 %v604
        %628 = vmatprep.subr.bf16.mxu0 0
        %629 = vmatpush1.bf16.msra.mxu0 %v605
        %630 = vmatprep.subr.bf16.mxu0 0
        %631 = vmatpush1.bf16.msra.mxu0 0
        %632 = vmatprep.subr.bf16.mxu0 0
        %633 = vmatpush1.bf16.msra.mxu0 0
        %634 = vmatprep.subr.bf16.mxu0 0
        %635 = vmatpush1.bf16.msra.mxu0 0
        %636 = vmatprep.subr.bf16.mxu0 0
        %637 = vmatpush1.bf16.msra.mxu0 0
        %638 = vmatprep.subr.bf16.mxu0 0
        %639 = vmatpush1.bf16.msra.mxu0 0
        %640 = vmatprep.subr.bf16.mxu0 0
        %641 = vmatpush1.bf16.msra.mxu0 0
        %642 = vmatprep.subr.bf16.mxu0 0
        %643 = vmatpush1.bf16.msra.mxu0 0
        %644 = vmatprep.subr.bf16.mxu0 0
        %645 = vmatpush1.bf16.msra.mxu0 0
        %646 = vmatprep.mubr.bf16.mxu0 0
        %647 = vmatmul.mubr.bf16.gmra.mrb[0].mxu0 %v502
        %v648 = vpop.f32.mrb[0].mxu0
        %v649 = vadd.f32 0.0, %v648
        %v650 = vpop.f32.mrb[0].mxu0
        %v651 = vpop.f32.mrb[0].mxu0
        %v652 = vadd.f32 0.0, %v651
        %v653 = vpop.f32.mrb[0].mxu0
        %654 = vmatprep.mubr.bf16.mxu0 0
        %655 = vmatmul.mubr.bf16.gmra.mrb[0].mxu0 %v503
        %v656 = vpop.f32.mrb[0].mxu0
        %v657 = vadd.f32 0.0, %v656
        %v658 = vpop.f32.mrb[0].mxu0
        %v659 = vpop.f32.mrb[0].mxu0
        %v660 = vadd.f32 0.0, %v659
        %v661 = vpop.f32.mrb[0].mxu0
        %662 = vmatprep.mubr.bf16.mxu0 0
        %663 = vmatmul.mubr.bf16.gmra.mrb[0].mxu0 %v504
        %v664 = vpop.f32.mrb[0].mxu0
        %v665 = vadd.f32 0.0, %v664
        %v666 = vpop.f32.mrb[0].mxu0
        %v667 = vpop.f32.mrb[0].mxu0
        %v668 = vadd.f32 0.0, %v667
        %v669 = vpop.f32.mrb[0].mxu0
        %670 = vmatprep.mubr.bf16.mxu0 0
        %671 = vmatmul.mubr.bf16.gmra.mrb[0].mxu0 %v505
        %v672 = vpop.f32.mrb[0].mxu0
        %v673 = vadd.f32 0.0, %v672
        %v674 = vpop.f32.mrb[0].mxu0
        %v675 = vpop.f32.mrb[0].mxu0
        %v676 = vadd.f32 0.0, %v675
        %v677 = vpop.f32.mrb[0].mxu0
        %678 = vmatprep.mubr.bf16.mxu0 0
        %679 = vmatmul.mubr.bf16.gmra.mrb[0].mxu0 %v506
        %v680 = vpop.f32.mrb[0].mxu0
        %v681 = vadd.f32 0.0, %v680
        %v682 = vpop.f32.mrb[0].mxu0
        %v683 = vpop.f32.mrb[0].mxu0
        %v684 = vadd.f32 0.0, %v683
        %v685 = vpop.f32.mrb[0].mxu0
        %686 = vmatprep.mubr.bf16.mxu0 0
        %687 = vmatmul.mubr.bf16.gmra.mrb[0].mxu0 %v507
        %v688 = vpop.f32.mrb[0].mxu0
        %v689 = vadd.f32 0.0, %v688
        %v690 = vpop.f32.mrb[0].mxu0
        %v691 = vpop.f32.mrb[0].mxu0
        %v692 = vadd.f32 0.0, %v691
        %v693 = vpop.f32.mrb[0].mxu0
        %694 = vmatprep.mubr.bf16.mxu0 0
        %695 = vmatmul.mubr.bf16.gmra.mrb[0].mxu0 %v508
        %v696 = vpop.f32.mrb[0].mxu0
        %v697 = vadd.f32 0.0, %v696
        %v698 = vpop.f32.mrb[0].mxu0
        %v699 = vpop.f32.mrb[0].mxu0
        %v700 = vadd.f32 0.0, %v699
        %v701 = vpop.f32.mrb[0].mxu0
        %702 = vmatprep.mubr.bf16.mxu0 0
        %703 = vmatmul.mubr.bf16.gmra.mrb[0].mxu0 %v509
        %v704 = vpop.f32.mrb[0].mxu0
        %v705 = vadd.f32 0.0, %v704
        %v706 = vpop.f32.mrb[0].mxu0
        %v707 = vpop.f32.mrb[0].mxu0
        %v708 = vadd.f32 0.0, %v707
        %v709 = vpop.f32.mrb[0].mxu0
        %710 = vmatprep.mubr.bf16.mxu0 0
        %711 = vmatmul.mubr.bf16.gmra.mrb[0].mxu0 %v510
        %v712 = vpop.f32.mrb[0].mxu0
        %v713 = vadd.f32 0.0, %v712
        %v714 = vpop.f32.mrb[0].mxu0
        %v715 = vpop.f32.mrb[0].mxu0
        %v716 = vadd.f32 0.0, %v715
        %v717 = vpop.f32.mrb[0].mxu0
        %718 = vmatprep.mubr.bf16.mxu0 0
        %719 = vmatmul.mubr.bf16.gmra.mrb[0].mxu0 %v511
        %v720 = vpop.f32.mrb[0].mxu0
        %v721 = vadd.f32 0.0, %v720
        %v722 = vpop.f32.mrb[0].mxu0
        %v723 = vpop.f32.mrb[0].mxu0
        %v724 = vadd.f32 0.0, %v723
        %v725 = vpop.f32.mrb[0].mxu0
        %726 = vmatprep.mubr.bf16.mxu0 0
        %727 = vmatmul.mubr.bf16.gmra.mrb[0].mxu0 %v512
        %v728 = vpop.f32.mrb[0].mxu0
        %v729 = vadd.f32 0.0, %v728
        %v730 = vpop.f32.mrb[0].mxu0
        %v731 = vpop.f32.mrb[0].mxu0
        %v732 = vadd.f32 0.0, %v731
        %v733 = vpop.f32.mrb[0].mxu0
        %734 = vmatprep.mubr.bf16.mxu0 0
        %735 = vmatmul.mubr.bf16.gmra.mrb[0].mxu0 %v513
        %v736 = vpop.f32.mrb[0].mxu0
        %v737 = vadd.f32 0.0, %v736
        %v738 = vpop.f32.mrb[0].mxu0
        %v739 = vpop.f32.mrb[0].mxu0
        %v740 = vadd.f32 0.0, %v739
        %v741 = vpop.f32.mrb[0].mxu0
        %742 = vmatprep.mubr.bf16.mxu0 0
        %743 = vmatmul.mubr.bf16.gmra.mrb[0].mxu0 %v514
        %v744 = vpop.f32.mrb[0].mxu0
        %v745 = vadd.f32 0.0, %v744
        %v746 = vpop.f32.mrb[0].mxu0
        %v747 = vpop.f32.mrb[0].mxu0
        %v748 = vadd.f32 0.0, %v747
        %v749 = vpop.f32.mrb[0].mxu0
        %750 = vmatprep.mubr.bf16.mxu0 0
        %751 = vmatmul.mubr.bf16.gmra.mrb[0].mxu0 %v515
        %v752 = vpop.f32.mrb[0].mxu0
        %v753 = vadd.f32 0.0, %v752
        %v754 = vpop.f32.mrb[0].mxu0
        %v755 = vpop.f32.mrb[0].mxu0
        %v756 = vadd.f32 0.0, %v755
        %v757 = vpop.f32.mrb[0].mxu0
        %758 = vmatprep.mubr.bf16.mxu0 0
        %759 = vmatmul.mubr.bf16.gmra.mrb[0].mxu0 %v516
        %v760 = vpop.f32.mrb[0].mxu0
        %v761 = vadd.f32 0.0, %v760
        %v762 = vpop.f32.mrb[0].mxu0
        %v763 = vpop.f32.mrb[0].mxu0
        %v764 = vadd.f32 0.0, %v763
        %v765 = vpop.f32.mrb[0].mxu0
        %766 = vmatprep.mubr.bf16.mxu0 0
        %767 = vmatmul.mubr.bf16.gmra.mrb[0].mxu0 %v517
        %v768 = vpop.f32.mrb[0].mxu0
        %v769 = vadd.f32 0.0, %v768
        %v770 = vpop.f32.mrb[0].mxu0
        %v771 = vpop.f32.mrb[0].mxu0
        %v772 = vadd.f32 0.0, %v771
        %v773 = vpop.f32.mrb[0].mxu0
        %774 = vmatprep.mubr.bf16.mxu0 0
        %775 = vmatmul.mubr.bf16.gmra.mrb[0].mxu0 %v518
        %v776 = vpop.f32.mrb[0].mxu0
        %v777 = vadd.f32 0.0, %v776
        %v778 = vpop.f32.mrb[0].mxu0
        %v779 = vpop.f32.mrb[0].mxu0
        %v780 = vadd.f32 0.0, %v779
        %v781 = vpop.f32.mrb[0].mxu0
        %782 = vmatprep.mubr.bf16.mxu0 0
        %783 = vmatmul.mubr.bf16.gmra.mrb[0].mxu0 %v519
        %v784 = vpop.f32.mrb[0].mxu0
        %v785 = vadd.f32 0.0, %v784
        %v786 = vpop.f32.mrb[0].mxu0
        %v787 = vpop.f32.mrb[0].mxu0
        %v788 = vadd.f32 0.0, %v787
        %v789 = vpop.f32.mrb[0].mxu0
        %790 = vmatprep.mubr.bf16.mxu0 0
        %791 = vmatmul.mubr.bf16.gmra.mrb[0].mxu0 %v520
        %v792 = vpop.f32.mrb[0].mxu0
        %v793 = vadd.f32 0.0, %v792
        %v794 = vpop.f32.mrb[0].mxu0
        %v795 = vpop.f32.mrb[0].mxu0
        %v796 = vadd.f32 0.0, %v795
        %v797 = vpop.f32.mrb[0].mxu0
        %798 = vmatprep.mubr.bf16.mxu0 0
        %799 = vmatmul.mubr.bf16.gmra.mrb[0].mxu0 %v521
        %v800 = vpop.f32.mrb[0].mxu0
        %v801 = vadd.f32 0.0, %v800
        %v802 = vpop.f32.mrb[0].mxu0
        %v803 = vpop.f32.mrb[0].mxu0
        %v804 = vadd.f32 0.0, %v803
        %v805 = vpop.f32.mrb[0].mxu0
        %806 = vmatprep.mubr.bf16.mxu0 0
        %807 = vmatmul.mubr.bf16.gmra.mrb[0].mxu0 %v522
        %v808 = vpop.f32.mrb[0].mxu0
        %v809 = vadd.f32 0.0, %v808
        %v810 = vpop.f32.mrb[0].mxu0
        %v811 = vpop.f32.mrb[0].mxu0
        %v812 = vadd.f32 0.0, %v811
        %v813 = vpop.f32.mrb[0].mxu0
        %814 = vmatprep.mubr.bf16.mxu0 0
        %815 = vmatmul.mubr.bf16.gmra.mrb[0].mxu0 %v523
        %v816 = vpop.f32.mrb[0].mxu0
        %v817 = vadd.f32 0.0, %v816
        %v818 = vpop.f32.mrb[0].mxu0
        %v819 = vpop.f32.mrb[0].mxu0
        %v820 = vadd.f32 0.0, %v819
        %v821 = vpop.f32.mrb[0].mxu0
        %822 = vmatprep.mubr.bf16.mxu0 0
        %823 = vmatmul.mubr.bf16.gmra.mrb[0].mxu0 %v524
        %v824 = vpop.f32.mrb[0].mxu0
        %v825 = vadd.f32 0.0, %v824
        %v826 = vpop.f32.mrb[0].mxu0
        %v827 = vpop.f32.mrb[0].mxu0
        %v828 = vadd.f32 0.0, %v827
        %v829 = vpop.f32.mrb[0].mxu0
        %830 = vmatprep.mubr.bf16.mxu0 0
        %831 = vmatmul.mubr.bf16.gmra.mrb[0].mxu0 %v525
        %v832 = vpop.f32.mrb[0].mxu0
        %v833 = vadd.f32 0.0, %v832
        %v834 = vpop.f32.mrb[0].mxu0
        %v835 = vpop.f32.mrb[0].mxu0
        %v836 = vadd.f32 0.0, %v835
        %v837 = vpop.f32.mrb[0].mxu0
        %838 = vmatprep.mubr.bf16.mxu0 0
        %839 = vmatmul.mubr.bf16.gmra.mrb[0].mxu0 %v526
        %v840 = vpop.f32.mrb[0].mxu0
        %v841 = vadd.f32 0.0, %v840
        %v842 = vpop.f32.mrb[0].mxu0
        %v843 = vpop.f32.mrb[0].mxu0
        %v844 = vadd.f32 0.0, %v843
        %v845 = vpop.f32.mrb[0].mxu0
        %846 = vmatprep.mubr.bf16.mxu0 0
        %847 = vmatmul.mubr.bf16.gmra.mrb[0].mxu0 %v527
        %v848 = vpop.f32.mrb[0].mxu0
        %v849 = vadd.f32 0.0, %v848
        %v850 = vpop.f32.mrb[0].mxu0
        %v851 = vpop.f32.mrb[0].mxu0
        %v852 = vadd.f32 0.0, %v851
        %v853 = vpop.f32.mrb[0].mxu0
        %854 = vmatprep.mubr.bf16.mxu0 0
        %855 = vmatmul.mubr.bf16.gmra.mrb[0].mxu0 %v528
        %v856 = vpop.f32.mrb[0].mxu0
        %v857 = vadd.f32 0.0, %v856
        %v858 = vpop.f32.mrb[0].mxu0
        %v859 = vpop.f32.mrb[0].mxu0
        %v860 = vadd.f32 0.0, %v859
        %v861 = vpop.f32.mrb[0].mxu0
        %862 = vmatprep.mubr.bf16.mxu0 0
        %863 = vmatmul.mubr.bf16.gmra.mrb[0].mxu0 %v529
        %v864 = vpop.f32.mrb[0].mxu0
        %v865 = vadd.f32 0.0, %v864
        %v866 = vpop.f32.mrb[0].mxu0
        %v867 = vpop.f32.mrb[0].mxu0
        %v868 = vadd.f32 0.0, %v867
        %v869 = vpop.f32.mrb[0].mxu0
        %870 = vmatprep.mubr.bf16.mxu0 0
        %871 = vmatmul.mubr.bf16.gmra.mrb[0].mxu0 %v530
        %v872 = vpop.f32.mrb[0].mxu0
        %v873 = vadd.f32 0.0, %v872
        %v874 = vpop.f32.mrb[0].mxu0
        %v875 = vpop.f32.mrb[0].mxu0
        %v876 = vadd.f32 0.0, %v875
        %v877 = vpop.f32.mrb[0].mxu0
        %878 = vmatprep.mubr.bf16.mxu0 0
        %879 = vmatmul.mubr.bf16.gmra.mrb[0].mxu0 %v531
        %v880 = vpop.f32.mrb[0].mxu0
        %v881 = vadd.f32 0.0, %v880
        %v882 = vpop.f32.mrb[0].mxu0
        %v883 = vpop.f32.mrb[0].mxu0
        %v884 = vadd.f32 0.0, %v883
        %v885 = vpop.f32.mrb[0].mxu0
        %886 = vmatprep.mubr.bf16.mxu0 0
        %887 = vmatmul.mubr.bf16.gmra.mrb[0].mxu0 %v532
        %v888 = vpop.f32.mrb[0].mxu0
        %v889 = vadd.f32 0.0, %v888
        %v890 = vpop.f32.mrb[0].mxu0
        %v891 = vpop.f32.mrb[0].mxu0
        %v892 = vadd.f32 0.0, %v891
        %v893 = vpop.f32.mrb[0].mxu0
        %894 = vmatprep.mubr.bf16.mxu0 0
        %895 = vmatmul.mubr.bf16.gmra.mrb[0].mxu0 %v533
        %v896 = vpop.f32.mrb[0].mxu0
        %v897 = vadd.f32 0.0, %v896
        %v898 = vpop.f32.mrb[0].mxu0
        %v899 = vpop.f32.mrb[0].mxu0
        %v900 = vadd.f32 0.0, %v899
        %v901 = vpop.f32.mrb[0].mxu0
        %902 = vdwg.mxu0
        %v903 = vld [vmem:[#allocation7] sm:$0x1]
        %v905 = vlaneseq
        %v906 = vshrl.u32 %v905, 7
        %v907 = vsub.s32 0, %v906
        %v908 = vrot.slane %v903, %v907
        %v910 = vmul.f32 %v649, %v908
        %v911 = vmul.f32 %v652, %v908
        %v912 = vmul.f32 %v657, %v908
        %v913 = vmul.f32 %v660, %v908
        %v914 = vmul.f32 %v665, %v908
        %v915 = vmul.f32 %v668, %v908
        %v916 = vmul.f32 %v673, %v908
        %v917 = vmul.f32 %v676, %v908
        %v918 = vmul.f32 %v681, %v908
        %v919 = vmul.f32 %v684, %v908
        %v920 = vmul.f32 %v689, %v908
        %v921 = vmul.f32 %v692, %v908
        %v922 = vmul.f32 %v697, %v908
        %v923 = vmul.f32 %v700, %v908
        %v924 = vmul.f32 %v705, %v908
        %v925 = vmul.f32 %v708, %v908
        %v926 = vmul.f32 %v713, %v908
        %v927 = vmul.f32 %v716, %v908
        %v928 = vmul.f32 %v721, %v908
        %v929 = vmul.f32 %v724, %v908
        %v930 = vmul.f32 %v729, %v908
        %v931 = vmul.f32 %v732, %v908
        %v932 = vmul.f32 %v737, %v908
        %v933 = vmul.f32 %v740, %v908
        %v934 = vmul.f32 %v745, %v908
        %v935 = vmul.f32 %v748, %v908
        %v936 = vmul.f32 %v753, %v908
        %v937 = vmul.f32 %v756, %v908
        %v938 = vmul.f32 %v761, %v908
        %v939 = vmul.f32 %v764, %v908
        %v940 = vmul.f32 %v769, %v908
        %v941 = vmul.f32 %v772, %v908
        %v942 = vmul.f32 %v777, %v908
        %v943 = vmul.f32 %v780, %v908
        %v944 = vmul.f32 %v785, %v908
        %v945 = vmul.f32 %v788, %v908
        %v946 = vmul.f32 %v793, %v908
        %v947 = vmul.f32 %v796, %v908
        %v948 = vmul.f32 %v801, %v908
        %v949 = vmul.f32 %v804, %v908
        %v950 = vmul.f32 %v809, %v908
        %v951 = vmul.f32 %v812, %v908
        %v952 = vmul.f32 %v817, %v908
        %v953 = vmul.f32 %v820, %v908
        %v954 = vmul.f32 %v825, %v908
        %v955 = vmul.f32 %v828, %v908
        %v956 = vmul.f32 %v833, %v908
        %v957 = vmul.f32 %v836, %v908
        %v958 = vmul.f32 %v841, %v908
        %v959 = vmul.f32 %v844, %v908
        %v960 = vmul.f32 %v849, %v908
        %v961 = vmul.f32 %v852, %v908
        %v962 = vmul.f32 %v857, %v908
        %v963 = vmul.f32 %v860, %v908
        %v964 = vmul.f32 %v865, %v908
        %v965 = vmul.f32 %v868, %v908
        %v966 = vmul.f32 %v873, %v908
        %v967 = vmul.f32 %v876, %v908
        %v968 = vmul.f32 %v881, %v908
        %v969 = vmul.f32 %v884, %v908
        %v970 = vmul.f32 %v889, %v908
        %v971 = vmul.f32 %v892, %v908
        %v972 = vmul.f32 %v897, %v908
        %v973 = vmul.f32 %v900, %v908
        %v974 = vld [vmem:[#allocation8] sm:$0x1]
        %v976 = vlaneseq
        %v977 = vshrl.u32 %v976, 7
        %v978 = vsub.s32 0, %v977
        %v979 = vrot.slane %v974, %v978
        %v981 = vadd.f32 %v910, %v979
        %v982 = vadd.f32 %v911, %v979
        %v983 = vadd.f32 %v912, %v979
        %v984 = vadd.f32 %v913, %v979
        %v985 = vadd.f32 %v914, %v979
        %v986 = vadd.f32 %v915, %v979
        %v987 = vadd.f32 %v916, %v979
        %v988 = vadd.f32 %v917, %v979
        %v989 = vadd.f32 %v918, %v979
        %v990 = vadd.f32 %v919, %v979
        %v991 = vadd.f32 %v920, %v979
        %v992 = vadd.f32 %v921, %v979
        %v993 = vadd.f32 %v922, %v979
        %v994 = vadd.f32 %v923, %v979
        %v995 = vadd.f32 %v924, %v979
        %v996 = vadd.f32 %v925, %v979
        %v997 = vadd.f32 %v926, %v979
        %v998 = vadd.f32 %v927, %v979
        %v999 = vadd.f32 %v928, %v979
        %v1000 = vadd.f32 %v929, %v979
        %v1001 = vadd.f32 %v930, %v979
        %v1002 = vadd.f32 %v931, %v979
        %v1003 = vadd.f32 %v932, %v979
        %v1004 = vadd.f32 %v933, %v979
        %v1005 = vadd.f32 %v934, %v979
        %v1006 = vadd.f32 %v935, %v979
        %v1007 = vadd.f32 %v936, %v979
        %v1008 = vadd.f32 %v937, %v979
        %v1009 = vadd.f32 %v938, %v979
        %v1010 = vadd.f32 %v939, %v979
        %v1011 = vadd.f32 %v940, %v979
        %v1012 = vadd.f32 %v941, %v979
        %v1013 = vadd.f32 %v942, %v979
        %v1014 = vadd.f32 %v943, %v979
        %v1015 = vadd.f32 %v944, %v979
        %v1016 = vadd.f32 %v945, %v979
        %v1017 = vadd.f32 %v946, %v979
        %v1018 = vadd.f32 %v947, %v979
        %v1019 = vadd.f32 %v948, %v979
        %v1020 = vadd.f32 %v949, %v979
        %v1021 = vadd.f32 %v950, %v979
        %v1022 = vadd.f32 %v951, %v979
        %v1023 = vadd.f32 %v952, %v979
        %v1024 = vadd.f32 %v953, %v979
        %v1025 = vadd.f32 %v954, %v979
        %v1026 = vadd.f32 %v955, %v979
        %v1027 = vadd.f32 %v956, %v979
        %v1028 = vadd.f32 %v957, %v979
        %v1029 = vadd.f32 %v958, %v979
        %v1030 = vadd.f32 %v959, %v979
        %v1031 = vadd.f32 %v960, %v979
        %v1032 = vadd.f32 %v961, %v979
        %v1033 = vadd.f32 %v962, %v979
        %v1034 = vadd.f32 %v963, %v979
        %v1035 = vadd.f32 %v964, %v979
        %v1036 = vadd.f32 %v965, %v979
        %v1037 = vadd.f32 %v966, %v979
        %v1038 = vadd.f32 %v967, %v979
        %v1039 = vadd.f32 %v968, %v979
        %v1040 = vadd.f32 %v969, %v979
        %v1041 = vadd.f32 %v970, %v979
        %v1042 = vadd.f32 %v971, %v979
        %v1043 = vadd.f32 %v972, %v979
        %v1044 = vadd.f32 %v973, %v979
        %v1045 = vmax.f32 %v981, 0.0
        %v1046 = vmax.f32 %v982, 0.0
        %v1047 = vmax.f32 %v983, 0.0
        %v1048 = vmax.f32 %v984, 0.0
        %v1049 = vmax.f32 %v985, 0.0
        %v1050 = vmax.f32 %v986, 0.0
        %v1051 = vmax.f32 %v987, 0.0
        %v1052 = vmax.f32 %v988, 0.0
        %v1053 = vmax.f32 %v989, 0.0
        %v1054 = vmax.f32 %v990, 0.0
        %v1055 = vmax.f32 %v991, 0.0
        %v1056 = vmax.f32 %v992, 0.0
        %v1057 = vmax.f32 %v993, 0.0
        %v1058 = vmax.f32 %v994, 0.0
        %v1059 = vmax.f32 %v995, 0.0
        %v1060 = vmax.f32 %v996, 0.0
        %v1061 = vmax.f32 %v997, 0.0
        %v1062 = vmax.f32 %v998, 0.0
        %v1063 = vmax.f32 %v999, 0.0
        %v1064 = vmax.f32 %v1000, 0.0
        %v1065 = vmax.f32 %v1001, 0.0
        %v1066 = vmax.f32 %v1002, 0.0
        %v1067 = vmax.f32 %v1003, 0.0
        %v1068 = vmax.f32 %v1004, 0.0
        %v1069 = vmax.f32 %v1005, 0.0
        %v1070 = vmax.f32 %v1006, 0.0
        %v1071 = vmax.f32 %v1007, 0.0
        %v1072 = vmax.f32 %v1008, 0.0
        %v1073 = vmax.f32 %v1009, 0.0
        %v1074 = vmax.f32 %v1010, 0.0
        %v1075 = vmax.f32 %v1011, 0.0
        %v1076 = vmax.f32 %v1012, 0.0
        %v1077 = vmax.f32 %v1013, 0.0
        %v1078 = vmax.f32 %v1014, 0.0
        %v1079 = vmax.f32 %v1015, 0.0
        %v1080 = vmax.f32 %v1016, 0.0
        %v1081 = vmax.f32 %v1017, 0.0
        %v1082 = vmax.f32 %v1018, 0.0
        %v1083 = vmax.f32 %v1019, 0.0
        %v1084 = vmax.f32 %v1020, 0.0
        %v1085 = vmax.f32 %v1021, 0.0
        %v1086 = vmax.f32 %v1022, 0.0
        %v1087 = vmax.f32 %v1023, 0.0
        %v1088 = vmax.f32 %v1024, 0.0
        %v1089 = vmax.f32 %v1025, 0.0
        %v1090 = vmax.f32 %v1026, 0.0
        %v1091 = vmax.f32 %v1027, 0.0
        %v1092 = vmax.f32 %v1028, 0.0
        %v1093 = vmax.f32 %v1029, 0.0
        %v1094 = vmax.f32 %v1030, 0.0
        %v1095 = vmax.f32 %v1031, 0.0
        %v1096 = vmax.f32 %v1032, 0.0
        %v1097 = vmax.f32 %v1033, 0.0
        %v1098 = vmax.f32 %v1034, 0.0
        %v1099 = vmax.f32 %v1035, 0.0
        %v1100 = vmax.f32 %v1036, 0.0
        %v1101 = vmax.f32 %v1037, 0.0
        %v1102 = vmax.f32 %v1038, 0.0
        %v1103 = vmax.f32 %v1039, 0.0
        %v1104 = vmax.f32 %v1040, 0.0
        %v1105 = vmax.f32 %v1041, 0.0
        %v1106 = vmax.f32 %v1042, 0.0
        %v1107 = vmax.f32 %v1043, 0.0
        %v1108 = vmax.f32 %v1044, 0.0
        %v1109 = vpack.c.bf16 %v1046, %v1045
        %v1110 = vpack.c.bf16 %v1048, %v1047
        %v1111 = vpack.c.bf16 %v1050, %v1049
        %v1112 = vpack.c.bf16 %v1052, %v1051
        %v1113 = vpack.c.bf16 %v1054, %v1053
        %v1114 = vpack.c.bf16 %v1056, %v1055
        %v1115 = vpack.c.bf16 %v1058, %v1057
        %v1116 = vpack.c.bf16 %v1060, %v1059
        %v1117 = vpack.c.bf16 %v1062, %v1061
        %v1118 = vpack.c.bf16 %v1064, %v1063
        %v1119 = vpack.c.bf16 %v1066, %v1065
        %v1120 = vpack.c.bf16 %v1068, %v1067
        %v1121 = vpack.c.bf16 %v1070, %v1069
        %v1122 = vpack.c.bf16 %v1072, %v1071
        %v1123 = vpack.c.bf16 %v1074, %v1073
        %v1124 = vpack.c.bf16 %v1076, %v1075
        %v1125 = vpack.c.bf16 %v1078, %v1077
        %v1126 = vpack.c.bf16 %v1080, %v1079
        %v1127 = vpack.c.bf16 %v1082, %v1081
        %v1128 = vpack.c.bf16 %v1084, %v1083
        %v1129 = vpack.c.bf16 %v1086, %v1085
        %v1130 = vpack.c.bf16 %v1088, %v1087
        %v1131 = vpack.c.bf16 %v1090, %v1089
        %v1132 = vpack.c.bf16 %v1092, %v1091
        %v1133 = vpack.c.bf16 %v1094, %v1093
        %v1134 = vpack.c.bf16 %v1096, %v1095
        %v1135 = vpack.c.bf16 %v1098, %v1097
        %v1136 = vpack.c.bf16 %v1100, %v1099
        %v1137 = vpack.c.bf16 %v1102, %v1101
        %v1138 = vpack.c.bf16 %v1104, %v1103
        %v1139 = vpack.c.bf16 %v1106, %v1105
        %v1140 = vpack.c.bf16 %v1108, %v1107
        %v1173 = vunpack.c.l.b16 %v1109
        %v1174 = vunpack.c.h.b16 %v1109
        %v1175 = vunpack.c.l.b16 %v1110
        %v1176 = vunpack.c.h.b16 %v1110
        %v1177 = vunpack.c.l.b16 %v1111
        %v1178 = vunpack.c.h.b16 %v1111
        %v1179 = vunpack.c.l.b16 %v1112
        %v1180 = vunpack.c.h.b16 %v1112
        %v1181 = vunpack.c.l.b16 %v1113
        %v1182 = vunpack.c.h.b16 %v1113
        %v1183 = vunpack.c.l.b16 %v1114
        %v1184 = vunpack.c.h.b16 %v1114
        %v1185 = vunpack.c.l.b16 %v1115
        %v1186 = vunpack.c.h.b16 %v1115
        %v1187 = vunpack.c.l.b16 %v1116
        %v1188 = vunpack.c.h.b16 %v1116
        %v1189 = vunpack.c.l.b16 %v1117
        %v1190 = vunpack.c.h.b16 %v1117
        %v1191 = vunpack.c.l.b16 %v1118
        %v1192 = vunpack.c.h.b16 %v1118
        %v1193 = vunpack.c.l.b16 %v1119
        %v1194 = vunpack.c.h.b16 %v1119
        %v1195 = vunpack.c.l.b16 %v1120
        %v1196 = vunpack.c.h.b16 %v1120
        %v1197 = vunpack.c.l.b16 %v1121
        %v1198 = vunpack.c.h.b16 %v1121
        %v1199 = vunpack.c.l.b16 %v1122
        %v1200 = vunpack.c.h.b16 %v1122
        %v1201 = vunpack.c.l.b16 %v1123
        %v1202 = vunpack.c.h.b16 %v1123
        %v1203 = vunpack.c.l.b16 %v1124
        %v1204 = vunpack.c.h.b16 %v1124
        %v1205 = vunpack.c.l.b16 %v1125
        %v1206 = vunpack.c.h.b16 %v1125
        %v1207 = vunpack.c.l.b16 %v1126
        %v1208 = vunpack.c.h.b16 %v1126
        %v1209 = vunpack.c.l.b16 %v1127
        %v1210 = vunpack.c.h.b16 %v1127
        %v1211 = vunpack.c.l.b16 %v1128
        %v1212 = vunpack.c.h.b16 %v1128
        %v1213 = vunpack.c.l.b16 %v1129
        %v1214 = vunpack.c.h.b16 %v1129
        %v1215 = vunpack.c.l.b16 %v1130
        %v1216 = vunpack.c.h.b16 %v1130
        %v1217 = vunpack.c.l.b16 %v1131
        %v1218 = vunpack.c.h.b16 %v1131
        %v1219 = vunpack.c.l.b16 %v1132
        %v1220 = vunpack.c.h.b16 %v1132
        %v1221 = vunpack.c.l.b16 %v1133
        %v1222 = vunpack.c.h.b16 %v1133
        %v1223 = vunpack.c.l.b16 %v1134
        %v1224 = vunpack.c.h.b16 %v1134
        %v1225 = vunpack.c.l.b16 %v1135
        %v1226 = vunpack.c.h.b16 %v1135
        %v1227 = vunpack.c.l.b16 %v1136
        %v1228 = vunpack.c.h.b16 %v1136
        %v1229 = vunpack.c.l.b16 %v1137
        %v1230 = vunpack.c.h.b16 %v1137
        %v1231 = vunpack.c.l.b16 %v1138
        %v1232 = vunpack.c.h.b16 %v1138
        %v1233 = vunpack.c.l.b16 %v1139
        %v1234 = vunpack.c.h.b16 %v1139
        %v1235 = vunpack.c.l.b16 %v1140
        %v1236 = vunpack.c.h.b16 %v1140
        %v1237 = vpack.c.b16 %v1173, %v1173
        %v1238 = vpack.c.b16 %v1174, %v1174
        %v1239 = vpack.c.b16 %v1175, %v1175
        %v1240 = vpack.c.b16 %v1176, %v1176
        %v1241 = vpack.c.b16 %v1177, %v1177
        %v1242 = vpack.c.b16 %v1178, %v1178
        %v1243 = vpack.c.b16 %v1179, %v1179
        %v1244 = vpack.c.b16 %v1180, %v1180
        %v1245 = vpack.c.b16 %v1181, %v1181
        %v1246 = vpack.c.b16 %v1182, %v1182
        %v1247 = vpack.c.b16 %v1183, %v1183
        %v1248 = vpack.c.b16 %v1184, %v1184
        %v1249 = vpack.c.b16 %v1185, %v1185
        %v1250 = vpack.c.b16 %v1186, %v1186
        %v1251 = vpack.c.b16 %v1187, %v1187
        %v1252 = vpack.c.b16 %v1188, %v1188
        %v1253 = vpack.c.b16 %v1189, %v1189
        %v1254 = vpack.c.b16 %v1190, %v1190
        %v1255 = vpack.c.b16 %v1191, %v1191
        %v1256 = vpack.c.b16 %v1192, %v1192
        %v1257 = vpack.c.b16 %v1193, %v1193
        %v1258 = vpack.c.b16 %v1194, %v1194
        %v1259 = vpack.c.b16 %v1195, %v1195
        %v1260 = vpack.c.b16 %v1196, %v1196
        %v1261 = vpack.c.b16 %v1197, %v1197
        %v1262 = vpack.c.b16 %v1198, %v1198
        %v1263 = vpack.c.b16 %v1199, %v1199
        %v1264 = vpack.c.b16 %v1200, %v1200
        %v1265 = vpack.c.b16 %v1201, %v1201
        %v1266 = vpack.c.b16 %v1202, %v1202
        %v1267 = vpack.c.b16 %v1203, %v1203
        %v1268 = vpack.c.b16 %v1204, %v1204
        %v1269 = vpack.c.b16 %v1205, %v1205
        %v1270 = vpack.c.b16 %v1206, %v1206
        %v1271 = vpack.c.b16 %v1207, %v1207
        %v1272 = vpack.c.b16 %v1208, %v1208
        %v1273 = vpack.c.b16 %v1209, %v1209
        %v1274 = vpack.c.b16 %v1210, %v1210
        %v1275 = vpack.c.b16 %v1211, %v1211
        %v1276 = vpack.c.b16 %v1212, %v1212
        %v1277 = vpack.c.b16 %v1213, %v1213
        %v1278 = vpack.c.b16 %v1214, %v1214
        %v1279 = vpack.c.b16 %v1215, %v1215
        %v1280 = vpack.c.b16 %v1216, %v1216
        %v1281 = vpack.c.b16 %v1217, %v1217
        %v1282 = vpack.c.b16 %v1218, %v1218
        %v1283 = vpack.c.b16 %v1219, %v1219
        %v1284 = vpack.c.b16 %v1220, %v1220
        %v1285 = vpack.c.b16 %v1221, %v1221
        %v1286 = vpack.c.b16 %v1222, %v1222
        %v1287 = vpack.c.b16 %v1223, %v1223
        %v1288 = vpack.c.b16 %v1224, %v1224
        %v1289 = vpack.c.b16 %v1225, %v1225
        %v1290 = vpack.c.b16 %v1226, %v1226
        %v1291 = vpack.c.b16 %v1227, %v1227
        %v1292 = vpack.c.b16 %v1228, %v1228
        %v1293 = vpack.c.b16 %v1229, %v1229
        %v1294 = vpack.c.b16 %v1230, %v1230
        %v1295 = vpack.c.b16 %v1231, %v1231
        %v1296 = vpack.c.b16 %v1232, %v1232
        %v1297 = vpack.c.b16 %v1233, %v1233
        %v1298 = vpack.c.b16 %v1234, %v1234
        %v1299 = vpack.c.b16 %v1235, %v1235
        %v1300 = vpack.c.b16 %v1236, %v1236
        %1365 = vst [vmem:[%s290] sm:$0xf] %v1237
        %1366 = vst [vmem:[%s290 + $0x4] sm:$0xf] %v1238
        %1367 = vst [vmem:[%s290 + $0x8] sm:$0xf] %v1239
        %1368 = vst [vmem:[%s290 + $0xc] sm:$0xf] %v1240
        %1369 = vst [vmem:[%s290 + $0x10] sm:$0xf] %v1241
        %1370 = vst [vmem:[%s290 + $0x14] sm:$0xf] %v1242
        %1371 = vst [vmem:[%s290 + $0x18] sm:$0xf] %v1243
        %1372 = vst [vmem:[%s290 + $0x1c] sm:$0xf] %v1244
        %1373 = vst [vmem:[%s290 + $0x20] sm:$0xf] %v1245
        %1374 = vst [vmem:[%s290 + $0x24] sm:$0xf] %v1246
        %1375 = vst [vmem:[%s290 + $0x28] sm:$0xf] %v1247
        %1376 = vst [vmem:[%s290 + $0x2c] sm:$0xf] %v1248
        %1377 = vst [vmem:[%s290 + $0x30] sm:$0xf] %v1249
        %1378 = vst [vmem:[%s290 + $0x34] sm:$0xf] %v1250
        %1379 = vst [vmem:[%s290 + $0x38] sm:$0xf] %v1251
        %1380 = vst [vmem:[%s290 + $0x3c] sm:$0xf] %v1252
        %1381 = vst [vmem:[%s290 + $0x40] sm:$0xf] %v1253
        %1382 = vst [vmem:[%s290 + $0x44] sm:$0xf] %v1254
        %1383 = vst [vmem:[%s290 + $0x48] sm:$0xf] %v1255
        %1384 = vst [vmem:[%s290 + $0x4c] sm:$0xf] %v1256
        %1385 = vst [vmem:[%s290 + $0x50] sm:$0xf] %v1257
        %1386 = vst [vmem:[%s290 + $0x54] sm:$0xf] %v1258
        %1387 = vst [vmem:[%s290 + $0x58] sm:$0xf] %v1259
        %1388 = vst [vmem:[%s290 + $0x5c] sm:$0xf] %v1260
        %1389 = vst [vmem:[%s290 + $0x60] sm:$0xf] %v1261
        %1390 = vst [vmem:[%s290 + $0x64] sm:$0xf] %v1262
        %1391 = vst [vmem:[%s290 + $0x68] sm:$0xf] %v1263
        %1392 = vst [vmem:[%s290 + $0x6c] sm:$0xf] %v1264
        %1393 = vst [vmem:[%s290 + $0x70] sm:$0xf] %v1265
        %1394 = vst [vmem:[%s290 + $0x74] sm:$0xf] %v1266
        %1395 = vst [vmem:[%s290 + $0x78] sm:$0xf] %v1267
        %1396 = vst [vmem:[%s290 + $0x7c] sm:$0xf] %v1268
        %1397 = vst [vmem:[%s290 + $0x80] sm:$0xf] %v1269
        %1398 = vst [vmem:[%s290 + $0x84] sm:$0xf] %v1270
        %1399 = vst [vmem:[%s290 + $0x88] sm:$0xf] %v1271
        %1400 = vst [vmem:[%s290 + $0x8c] sm:$0xf] %v1272
        %1401 = vst [vmem:[%s290 + $0x90] sm:$0xf] %v1273
        %1402 = vst [vmem:[%s290 + $0x94] sm:$0xf] %v1274
        %1403 = vst [vmem:[%s290 + $0x98] sm:$0xf] %v1275
        %1404 = vst [vmem:[%s290 + $0x9c] sm:$0xf] %v1276
        %1405 = vst [vmem:[%s290 + $0xa0] sm:$0xf] %v1277
        %1406 = vst [vmem:[%s290 + $0xa4] sm:$0xf] %v1278
        %1407 = vst [vmem:[%s290 + $0xa8] sm:$0xf] %v1279
        %1408 = vst [vmem:[%s290 + $0xac] sm:$0xf] %v1280
        %1409 = vst [vmem:[%s290 + $0xb0] sm:$0xf] %v1281
        %1410 = vst [vmem:[%s290 + $0xb4] sm:$0xf] %v1282
        %1411 = vst [vmem:[%s290 + $0xb8] sm:$0xf] %v1283
        %1412 = vst [vmem:[%s290 + $0xbc] sm:$0xf] %v1284
        %1413 = vst [vmem:[%s290 + $0xc0] sm:$0xf] %v1285
        %1414 = vst [vmem:[%s290 + $0xc4] sm:$0xf] %v1286
        %1415 = vst [vmem:[%s290 + $0xc8] sm:$0xf] %v1287
        %1416 = vst [vmem:[%s290 + $0xcc] sm:$0xf] %v1288
        %1417 = vst [vmem:[%s290 + $0xd0] sm:$0xf] %v1289
        %1418 = vst [vmem:[%s290 + $0xd4] sm:$0xf] %v1290
        %1419 = vst [vmem:[%s290 + $0xd8] sm:$0xf] %v1291
        %1420 = vst [vmem:[%s290 + $0xdc] sm:$0xf] %v1292
        %1421 = vst [vmem:[%s290 + $0xe0] sm:$0xf] %v1293
        %1422 = vst [vmem:[%s290 + $0xe4] sm:$0xf] %v1294
        %1423 = vst [vmem:[%s290 + $0xe8] sm:$0xf] %v1295
        %1424 = vst [vmem:[%s290 + $0xec] sm:$0xf] %v1296
        %1425 = vst [vmem:[%s290 + $0xf0] sm:$0xf] %v1297
        %1426 = vst [vmem:[%s290 + $0xf4] sm:$0xf] %v1298
        %1427 = vst [vmem:[%s290 + $0xf8] sm:$0xf] %v1299
        %1428 = vst [vmem:[%s290 + $0xfc] sm:$0xf] %v1300
        %s1429 = sand.u32 %s149, 1
        %s1430 = scalar_lea.sflag [#allocation4], %s1429
        %s1431 = sand.u32 %s149, 1
        %s1432 = smul.addr %s1431, 256
        %s1433 = scalar_lea.vmem [#allocation10], %s1432
        // Predicated region
        $region53: #{tpu_custom_call.1} parent=35 // pred_check
          %p1434 = pneg %p159
        $region54: #{tpu_custom_call.1} parent=35 // pred_check_branch
          %1436 = sbr.rel (%p1434) target = $region56
        $region55: #{tpu_custom_call.1} parent=35 // pred_region
          %s1437 = smul.u32 64, %s27
          %s1439 = ssub.s32 4096, 4096
          %1440 = vsyncadd %s1430, %s1439
          %s1441 = sadd.s32 %s28, %s1437
          %s1442 = smul.addr %s1441, 64
          %s1443 = scalar_lea.hbm %s4, %s1442
          %s1444 = sshll.u32 %s1433, 4
          %s1445 = int_to_ptr.vmem [resolvable:$true] %s1444
          %1450 = dma.vmem_to_hbm [thread:$0]  %s1445, 4096, %s1443, %s1430, 64, 64, 4
        $region56: #{tpu_custom_call.1} parent=35 // pred_fallthru
          _
      $region36: #{tpu_custom_call.1} parent=5 // pred_fallthru
        _
      %p1451 = scmp.le.s32.totalorder 2, %s18
      // Predicated region
      $region57: #{tpu_custom_call.1} parent=5 // pred_check
        %p1452 = pneg %p1451
      $region58: #{tpu_custom_call.1} parent=5 // pred_check_branch
        %1454 = sbr.rel (%p1452) target = $region60
      $region59: #{tpu_custom_call.1} parent=5 // pred_region
        %s1455 = ssub.s32 %s18, 2
        // Predicated region
        $region61: #{tpu_custom_call.1} parent=59 // pred_check
          %p1456 = pneg %p165
        $region62: #{tpu_custom_call.1} parent=59 // pred_check_branch
          %1458 = sbr.rel (%p1456) target = $region64
        $region63: #{tpu_custom_call.1} parent=59 // pred_region
          %s1459 = sand.u32 %s150, 1
          %s1460 = scalar_lea.sflag [#allocation4], %s1459
          %s1461 = sand.u32 %s150, 1
          %s1462 = smul.addr %s1461, 256
          %s1463 = scalar_lea.vmem [#allocation10], %s1462
          %1464 = dma.done %s1460, 4096
        $region64: #{tpu_custom_call.1} parent=59 // pred_fallthru
          _
      $region60: #{tpu_custom_call.1} parent=5 // pred_fallthru
        _
    $region6: #{tpu_custom_call.1} parent=1 // loop_footer
      %s22 = sadd.s32 1, %s18
    $region7: #{tpu_custom_call.1} parent=1 // loop_footer_branch
      %17 = sbr.rel target = $region3
    $region8: #{tpu_custom_call.1} parent=1 // loop_exit
      _
    %1465 = vsyncpa [#allocation3], 1
    %s1466 = scalar_lea.sflag [#allocation3], 1
    %1467 = vsyncpa %s1466, 1
    %1468 = vsyncpa [#allocation6], 1
    %1469 = vsyncpa [#allocation9], 1
    %1470 = vsyncpa [#allocation4], 1
    %s1471 = scalar_lea.sflag [#allocation4], 1
    %1472 = vsyncpa %s1471, 1

</llo_original>
